<compile_context>
chip_gen: v7x
topology: tpu7x:2x2x1
jax: 0.10.0
libtpu: 0.0.40
codegen_flags: <defaults>
</compile_context>

<pallas_src>
import functools

import jax
import jax.numpy as jnp
from jax import lax
from jax.experimental import pallas as pl
from jax.experimental.pallas import tpu as pltpu


def _conv_gn_relu_kernel(x_ref, w_ref, b_ref, g_ref, beta_ref, o_ref,
                         xp_ref, col_ref, *,
                         H, W, Hin, Win, Cin, Cout, KH, KW, pad, eps):
    # x_ref   : (Hin, Win, Cin)  bf16   one (unpadded) batch sample, NHWC
    # w_ref   : (Cout, K)        bf16   K = KH*KW*Cin, column order (kh, kw, ci)
    # b_ref   : (Cout, 1)        f32    conv bias
    # g_ref   : (Cout, 1)        f32    group-norm gamma
    # beta_ref: (Cout, 1)        f32    group-norm beta
    # o_ref   : (Cout, H*W)      f32    output (NCHW with spatial flattened on lanes)
    # xp_ref  : (Hp, Wp, Cin)    f32    zero-padded sample (VMEM scratch)
    # col_ref : (H*W, K)         f32    im2col slab (VMEM scratch)

    # --- fused zero padding (padding_mode='zeros') --------------------------
    xp_ref[...] = jnp.zeros_like(xp_ref)
    xp_ref[pad:pad + Hin, pad:pad + Win, :] = x_ref[...].astype(jnp.float32)

    # --- im2col: build the (H*W, KH*KW*Cin) patch slab ----------------------
    idx = 0
    for kh in range(KH):
        for kw in range(KW):
            win = xp_ref[kh:kh + H, kw:kw + W, :]            # (H, W, Cin)
            col_ref[:, idx * Cin:(idx + 1) * Cin] = win.reshape(H * W, Cin)
            idx += 1

    # --- single MXU matmul: (Cout, K) x (H*W, K)^T -> (Cout, H*W) -----------
    patches = col_ref[...].astype(jnp.bfloat16)              # (H*W, K)
    acc = lax.dot_general(
        w_ref[...], patches,
        dimension_numbers=(((1,), (1,)), ((), ())),
        preferred_element_type=jnp.float32)                  # (Cout, H*W) f32
    acc = acc + b_ref[...]                                    # conv bias (broadcast over lanes)

    # --- GroupNorm(num_groups=1): single-pass stats over (C, H, W) ----------
    n = float(Cout * H * W)
    s = jnp.sum(acc)
    ss = jnp.sum(acc * acc)
    mean = s / n
    var = ss / n - mean * mean
    inv = lax.rsqrt(var + eps)
    scale = g_ref[...] * inv                                  # (Cout, 1)
    shift = beta_ref[...] - mean * scale                      # (Cout, 1)

    # --- folded affine + ReLU + lane-dense store -----------------------------
    o_ref[...] = jnp.maximum(acc * scale + shift, 0.0).astype(o_ref.dtype)


def conv2d_block_with_group_norm(x_nchw, weight_oihw, bias, gamma, beta, *,
                                 stride=1, padding=1, eps=1e-5):
    """Pallas implementation of Conv2dBlockWithGroupNorm.forward (NCHW in/out)."""
    assert stride == 1  # TODO(synk): only the stride=1 path is implemented
    N, Cin, Hin, Win = x_nchw.shape
    Cout, Cin_w, KH, KW = weight_oihw.shape
    assert Cin_w == Cin
    H = Hin + 2 * padding - KH + 1
    W = Win + 2 * padding - KW + 1
    Hp, Wp = Hin + 2 * padding, Win + 2 * padding
    K = KH * KW * Cin

    # Glue (small, one pass): NCHW -> NHWC for channel-minor patches, bf16 MXU inputs.
    x_nhwc = jnp.transpose(x_nchw, (0, 2, 3, 1)).astype(jnp.bfloat16)
    # Weight (O,I,KH,KW) -> (Cout, K) with K ordered (kh, kw, ci) to match im2col.
    w_mat = jnp.transpose(weight_oihw, (0, 2, 3, 1)).reshape(Cout, K).astype(jnp.bfloat16)
    b2 = bias.reshape(Cout, 1).astype(jnp.float32)
    g2 = gamma.reshape(Cout, 1).astype(jnp.float32)
    be2 = beta.reshape(Cout, 1).astype(jnp.float32)

    kernel = functools.partial(
        _conv_gn_relu_kernel, H=H, W=W, Hin=Hin, Win=Win, Cin=Cin, Cout=Cout,
        KH=KH, KW=KW, pad=padding, eps=eps)

    flops = 2 * N * H * W * K * Cout
    bytes_accessed = (x_nhwc.size * 2 + w_mat.size * 2 + 3 * Cout * 4
                      + N * Cout * H * W * 4)

    out_flat = pl.pallas_call(
        kernel,
        out_shape=jax.ShapeDtypeStruct((N, Cout, H * W), jnp.float32),
        grid_spec=pltpu.PrefetchScalarGridSpec(
            num_scalar_prefetch=0,
            grid=(N,),
            in_specs=[
                pl.BlockSpec((None, Hin, Win, Cin), lambda n: (n, 0, 0, 0)),
                pl.BlockSpec((Cout, K), lambda n: (0, 0)),
                pl.BlockSpec((Cout, 1), lambda n: (0, 0)),
                pl.BlockSpec((Cout, 1), lambda n: (0, 0)),
                pl.BlockSpec((Cout, 1), lambda n: (0, 0)),
            ],
            out_specs=pl.BlockSpec((None, Cout, H * W), lambda n: (n, 0, 0)),
            scratch_shapes=[
                pltpu.VMEM((Hp, Wp, Cin), jnp.float32),   # zero-padded sample
                pltpu.VMEM((H * W, K), jnp.float32),      # im2col slab
            ]),
        compiler_params=pltpu.CompilerParams(
            dimension_semantics=("parallel",)),
        cost_estimate=pl.CostEstimate(
            flops=flops, transcendentals=N, bytes_accessed=bytes_accessed),
    )(x_nhwc, w_mat, b2, g2, be2)

    # (N, Cout, H*W) is already channel-major: NCHW is a free reshape.
    return out_flat.reshape(N, Cout, H, W)


def _reference(x_nchw, weight_oihw, bias, gamma, beta, *, padding=1, eps=1e-5):
    """Pure-JAX f32 reference matching the PyTorch module semantics."""
    y = lax.conv_general_dilated(
        x_nchw, weight_oihw, window_strides=(1, 1),
        padding=((padding, padding), (padding, padding)),
        dimension_numbers=('NCHW', 'OIHW', 'NCHW'))
    y = y + bias.reshape(1, -1, 1, 1)
    mean = jnp.mean(y, axis=(1, 2, 3), keepdims=True)
    var = jnp.var(y, axis=(1, 2, 3), keepdims=True)
    yn = (y - mean) / jnp.sqrt(var + eps)
    yn = yn * gamma.reshape(1, -1, 1, 1) + beta.reshape(1, -1, 1, 1)
    return jnp.maximum(yn, 0.0)


if __name__ == "__main__":
    # Small config consistent with the module:
    # in_channels=4, out_channels=8, kernel_size=3, stride=1, padding=1, bias=True
    N, Cin, Hin, Win = 2, 4, 16, 16
    Cout, KH, KW = 8, 3, 3
    padding = 1

    key = jax.random.PRNGKey(0)
    kx, kw = jax.random.split(key)

    # Deterministic parameter init mirroring __init__:
    #   conv weight: xavier_uniform_, conv bias: zeros,
    #   group_norm: weight=ones, bias=zeros.
    fan_in = Cin * KH * KW
    fan_out = Cout * KH * KW
    bound = (6.0 / (fan_in + fan_out)) ** 0.5
    conv_w = jax.random.uniform(kw, (Cout, Cin, KH, KW),
                                minval=-bound, maxval=bound, dtype=jnp.float32)
    conv_b = jnp.zeros((Cout,), jnp.float32)
    gn_gamma = jnp.ones((Cout,), jnp.float32)
    gn_beta = jnp.zeros((Cout,), jnp.float32)

    x = jax.random.normal(kx, (N, Cin, Hin, Win), dtype=jnp.float32)

    out = conv2d_block_with_group_norm(x, conv_w, conv_b, gn_gamma, gn_beta,
                                       stride=1, padding=padding)
    out = jax.block_until_ready(out)

    ref = jax.block_until_ready(
        _reference(x, conv_w, conv_b, gn_gamma, gn_beta, padding=padding))

    assert out.shape == (N, Cout, Hin, Win), out.shape
    # bf16 MXU inputs (f32 accumulation) -> tolerance loosened vs the pure-f32 path.
    assert jnp.allclose(out, ref, atol=3e-2, rtol=3e-2), \
        float(jnp.max(jnp.abs(out - ref)))

    print("KERNEL_OK")
</pallas_src>

<mosaic_0001>
module attributes {stable_mosaic.version = 11 : i64} {
  func.func @_conv_gn_relu_kernel(%arg0: i32, %arg1: memref<1x16x16x4xbf16, #tpu.memory_space<vmem>>, %arg2: memref<8x36xbf16, #tpu.memory_space<vmem>>, %arg3: memref<8x1xf32, #tpu.memory_space<vmem>>, %arg4: memref<8x1xf32, #tpu.memory_space<vmem>>, %arg5: memref<8x1xf32, #tpu.memory_space<vmem>>, %arg6: memref<1x8x256xf32, #tpu.memory_space<vmem>>, %arg7: memref<18x18x4xf32, #tpu.memory_space<vmem>>, %arg8: memref<256x36xf32, #tpu.memory_space<vmem>>) attributes {dimension_semantics = [#tpu.dimension_semantics<parallel>], iteration_bounds = array<i64: 2>, scalar_prefetch = 0 : i64, scratch_operands = 2 : i64, tpu.core_type = #tpu.core_type<tc>, window_params = [{transform_indices = @transform_0, window_bounds = array<i64: 1, 16, 16, 4>}, {pipeline_mode = #tpu.pipeline_mode<synchronous>, transform_indices = @transform_1, window_bounds = array<i64: 8, 36>}, {pipeline_mode = #tpu.pipeline_mode<synchronous>, transform_indices = @transform_2, window_bounds = array<i64: 8, 1>}, {pipeline_mode = #tpu.pipeline_mode<synchronous>, transform_indices = @transform_3, window_bounds = array<i64: 8, 1>}, {pipeline_mode = #tpu.pipeline_mode<synchronous>, transform_indices = @transform_4, window_bounds = array<i64: 8, 1>}, {transform_indices = @transform_5, window_bounds = array<i64: 1, 8, 256>}]} {
    %cst = arith.constant 0.000000e+00 : f32
    %0 = vector.broadcast %cst : f32 to vector<18x18x4xf32>
    %c0 = arith.constant 0 : index
    %c0_0 = arith.constant 0 : index
    %c0_1 = arith.constant 0 : index
    %1 = vector.load %arg7[%c0, %c0_0, %c0_1] : memref<18x18x4xf32, #tpu.memory_space<vmem>>, vector<18x18x4xf32>
    tpu.vector_store %arg7[%c0, %c0_0, %c0_1], %0 {strides = array<i32>} : memref<18x18x4xf32, #tpu.memory_space<vmem>>, vector<18x18x4xf32>,
    %c0_2 = arith.constant 0 : index
    %c0_3 = arith.constant 0 : index
    %c0_4 = arith.constant 0 : index
    %c0_5 = arith.constant 0 : index
    %2 = vector.load %arg1[%c0_2, %c0_3, %c0_4, %c0_5] : memref<1x16x16x4xbf16, #tpu.memory_space<vmem>>, vector<1x16x16x4xbf16>
    %3 = vector.shape_cast %2 : vector<1x16x16x4xbf16> to vector<16x16x4xbf16>
    %4 = arith.extf %3 : vector<16x16x4xbf16> to vector<16x16x4xf32>
    %c1 = arith.constant 1 : index
    %c1_6 = arith.constant 1 : index
    %c0_7 = arith.constant 0 : index
    %5 = vector.load %arg7[%c1, %c1_6, %c0_7] : memref<18x18x4xf32, #tpu.memory_space<vmem>>, vector<16x16x4xf32>
    tpu.vector_store %arg7[%c1, %c1_6, %c0_7], %4 {strides = array<i32>} : memref<18x18x4xf32, #tpu.memory_space<vmem>>, vector<16x16x4xf32>,
    %c0_8 = arith.constant 0 : index
    %c0_9 = arith.constant 0 : index
    %c0_10 = arith.constant 0 : index
    %6 = vector.load %arg7[%c0_8, %c0_9, %c0_10] : memref<18x18x4xf32, #tpu.memory_space<vmem>>, vector<16x16x4xf32>
    %7 = vector.shape_cast %6 : vector<16x16x4xf32> to vector<256x4xf32>
    %c0_11 = arith.constant 0 : index
    %c0_12 = arith.constant 0 : index
    %8 = vector.load %arg8[%c0_11, %c0_12] : memref<256x36xf32, #tpu.memory_space<vmem>>, vector<256x4xf32>
    tpu.vector_store %arg8[%c0_11, %c0_12], %7 {strides = array<i32>} : memref<256x36xf32, #tpu.memory_space<vmem>>, vector<256x4xf32>,
    %c0_13 = arith.constant 0 : index
    %c1_14 = arith.constant 1 : index
    %c0_15 = arith.constant 0 : index
    %9 = vector.load %arg7[%c0_13, %c1_14, %c0_15] : memref<18x18x4xf32, #tpu.memory_space<vmem>>, vector<16x16x4xf32>
    %10 = vector.shape_cast %9 : vector<16x16x4xf32> to vector<256x4xf32>
    %c0_16 = arith.constant 0 : index
    %c4 = arith.constant 4 : index
    %11 = vector.load %arg8[%c0_16, %c4] : memref<256x36xf32, #tpu.memory_space<vmem>>, vector<256x4xf32>
    tpu.vector_store %arg8[%c0_16, %c4], %10 {strides = array<i32>} : memref<256x36xf32, #tpu.memory_space<vmem>>, vector<256x4xf32>,
    %c0_17 = arith.constant 0 : index
    %c2 = arith.constant 2 : index
    %c0_18 = arith.constant 0 : index
    %12 = vector.load %arg7[%c0_17, %c2, %c0_18] : memref<18x18x4xf32, #tpu.memory_space<vmem>>, vector<16x16x4xf32>
    %13 = vector.shape_cast %12 : vector<16x16x4xf32> to vector<256x4xf32>
    %c0_19 = arith.constant 0 : index
    %c8 = arith.constant 8 : index
    %14 = vector.load %arg8[%c0_19, %c8] : memref<256x36xf32, #tpu.memory_space<vmem>>, vector<256x4xf32>
    tpu.vector_store %arg8[%c0_19, %c8], %13 {strides = array<i32>} : memref<256x36xf32, #tpu.memory_space<vmem>>, vector<256x4xf32>,
    %c1_20 = arith.constant 1 : index
    %c0_21 = arith.constant 0 : index
    %c0_22 = arith.constant 0 : index
    %15 = vector.load %arg7[%c1_20, %c0_21, %c0_22] : memref<18x18x4xf32, #tpu.memory_space<vmem>>, vector<16x16x4xf32>
    %16 = vector.shape_cast %15 : vector<16x16x4xf32> to vector<256x4xf32>
    %c0_23 = arith.constant 0 : index
    %c12 = arith.constant 12 : index
    %17 = vector.load %arg8[%c0_23, %c12] : memref<256x36xf32, #tpu.memory_space<vmem>>, vector<256x4xf32>
    tpu.vector_store %arg8[%c0_23, %c12], %16 {strides = array<i32>} : memref<256x36xf32, #tpu.memory_space<vmem>>, vector<256x4xf32>,
    %c1_24 = arith.constant 1 : index
    %c1_25 = arith.constant 1 : index
    %c0_26 = arith.constant 0 : index
    %18 = vector.load %arg7[%c1_24, %c1_25, %c0_26] : memref<18x18x4xf32, #tpu.memory_space<vmem>>, vector<16x16x4xf32>
    %19 = vector.shape_cast %18 : vector<16x16x4xf32> to vector<256x4xf32>
    %c0_27 = arith.constant 0 : index
    %c16 = arith.constant 16 : index
    %20 = vector.load %arg8[%c0_27, %c16] : memref<256x36xf32, #tpu.memory_space<vmem>>, vector<256x4xf32>
    tpu.vector_store %arg8[%c0_27, %c16], %19 {strides = array<i32>} : memref<256x36xf32, #tpu.memory_space<vmem>>, vector<256x4xf32>,
    %c1_28 = arith.constant 1 : index
    %c2_29 = arith.constant 2 : index
    %c0_30 = arith.constant 0 : index
    %21 = vector.load %arg7[%c1_28, %c2_29, %c0_30] : memref<18x18x4xf32, #tpu.memory_space<vmem>>, vector<16x16x4xf32>
    %22 = vector.shape_cast %21 : vector<16x16x4xf32> to vector<256x4xf32>
    %c0_31 = arith.constant 0 : index
    %c20 = arith.constant 20 : index
    %23 = vector.load %arg8[%c0_31, %c20] : memref<256x36xf32, #tpu.memory_space<vmem>>, vector<256x4xf32>
    tpu.vector_store %arg8[%c0_31, %c20], %22 {strides = array<i32>} : memref<256x36xf32, #tpu.memory_space<vmem>>, vector<256x4xf32>,
    %c2_32 = arith.constant 2 : index
    %c0_33 = arith.constant 0 : index
    %c0_34 = arith.constant 0 : index
    %24 = vector.load %arg7[%c2_32, %c0_33, %c0_34] : memref<18x18x4xf32, #tpu.memory_space<vmem>>, vector<16x16x4xf32>
    %25 = vector.shape_cast %24 : vector<16x16x4xf32> to vector<256x4xf32>
    %c0_35 = arith.constant 0 : index
    %c24 = arith.constant 24 : index
    %26 = vector.load %arg8[%c0_35, %c24] : memref<256x36xf32, #tpu.memory_space<vmem>>, vector<256x4xf32>
    tpu.vector_store %arg8[%c0_35, %c24], %25 {strides = array<i32>} : memref<256x36xf32, #tpu.memory_space<vmem>>, vector<256x4xf32>,
    %c2_36 = arith.constant 2 : index
    %c1_37 = arith.constant 1 : index
    %c0_38 = arith.constant 0 : index
    %27 = vector.load %arg7[%c2_36, %c1_37, %c0_38] : memref<18x18x4xf32, #tpu.memory_space<vmem>>, vector<16x16x4xf32>
    %28 = vector.shape_cast %27 : vector<16x16x4xf32> to vector<256x4xf32>
    %c0_39 = arith.constant 0 : index
    %c28 = arith.constant 28 : index
    %29 = vector.load %arg8[%c0_39, %c28] : memref<256x36xf32, #tpu.memory_space<vmem>>, vector<256x4xf32>
    tpu.vector_store %arg8[%c0_39, %c28], %28 {strides = array<i32>} : memref<256x36xf32, #tpu.memory_space<vmem>>, vector<256x4xf32>,
    %c2_40 = arith.constant 2 : index
    %c2_41 = arith.constant 2 : index
    %c0_42 = arith.constant 0 : index
    %30 = vector.load %arg7[%c2_40, %c2_41, %c0_42] : memref<18x18x4xf32, #tpu.memory_space<vmem>>, vector<16x16x4xf32>
    %31 = vector.shape_cast %30 : vector<16x16x4xf32> to vector<256x4xf32>
    %c0_43 = arith.constant 0 : index
    %c32 = arith.constant 32 : index
    %32 = vector.load %arg8[%c0_43, %c32] : memref<256x36xf32, #tpu.memory_space<vmem>>, vector<256x4xf32>
    tpu.vector_store %arg8[%c0_43, %c32], %31 {strides = array<i32>} : memref<256x36xf32, #tpu.memory_space<vmem>>, vector<256x4xf32>,
    %c0_44 = arith.constant 0 : index
    %c0_45 = arith.constant 0 : index
    %33 = vector.load %arg8[%c0_44, %c0_45] : memref<256x36xf32, #tpu.memory_space<vmem>>, vector<256x36xf32>
    %34 = arith.truncf %33 : vector<256x36xf32> to vector<256x36xbf16>
    %c0_46 = arith.constant 0 : index
    %c0_47 = arith.constant 0 : index
    %35 = vector.load %arg2[%c0_46, %c0_47] : memref<8x36xbf16, #tpu.memory_space<vmem>>, vector<8x36xbf16>
    %cst_48 = arith.constant dense<0.000000e+00> : vector<8x256xf32>
    %36 = tpu.matmul %35, %34, %cst_48 {dimension_numbers = #tpu.dot_dimension_numbers<[1], [1], [0], [0], [0, 0, 1, 0], [], []>} : vector<8x36xbf16>, vector<256x36xbf16>, vector<8x256xf32> -> vector<8x256xf32>
    %c0_49 = arith.constant 0 : index
    %c0_50 = arith.constant 0 : index
    %37 = vector.load %arg3[%c0_49, %c0_50] : memref<8x1xf32, #tpu.memory_space<vmem>>, vector<8x1xf32>
    %38 = vector.broadcast %37 : vector<8x1xf32> to vector<8x256xf32>
    %39 = arith.addf %36, %38 : vector<8x256xf32>
    %40 = vector.shape_cast %39 : vector<8x256xf32> to vector<1x8x256xf32>
    %cst_51 = arith.constant dense<0.000000e+00> : vector<1xf32>
    %41 = vector.multi_reduction <add>, %40, %cst_51 [1, 2] : vector<1x8x256xf32> to vector<1xf32>
    %42 = vector.shape_cast %41 : vector<1xf32> to vector<1x1x1xf32>
    %43 = vector.extract %42[0, 0, 0] : f32 from vector<1x1x1xf32>
    %44 = arith.mulf %39, %39 : vector<8x256xf32>
    %45 = vector.shape_cast %44 : vector<8x256xf32> to vector<1x8x256xf32>
    %cst_52 = arith.constant dense<0.000000e+00> : vector<1xf32>
    %46 = vector.multi_reduction <add>, %45, %cst_52 [1, 2] : vector<1x8x256xf32> to vector<1xf32>
    %47 = vector.shape_cast %46 : vector<1xf32> to vector<1x1x1xf32>
    %48 = vector.extract %47[0, 0, 0] : f32 from vector<1x1x1xf32>
    %cst_53 = arith.constant 2.048000e+03 : f32
    %49 = arith.divf %43, %cst_53 : f32
    %cst_54 = arith.constant 2.048000e+03 : f32
    %50 = arith.divf %48, %cst_54 : f32
    %51 = arith.mulf %49, %49 : f32
    %52 = arith.subf %50, %51 : f32
    %cst_55 = arith.constant 9.99999974E-6 : f32
    %53 = arith.addf %52, %cst_55 : f32
    %54 = math.rsqrt %53 : f32
    %c0_56 = arith.constant 0 : index
    %c0_57 = arith.constant 0 : index
    %55 = vector.load %arg4[%c0_56, %c0_57] : memref<8x1xf32, #tpu.memory_space<vmem>>, vector<8x1xf32>
    %56 = vector.broadcast %54 : f32 to vector<8x1xf32>
    %57 = arith.mulf %55, %56 : vector<8x1xf32>
    %c0_58 = arith.constant 0 : index
    %c0_59 = arith.constant 0 : index
    %58 = vector.load %arg5[%c0_58, %c0_59] : memref<8x1xf32, #tpu.memory_space<vmem>>, vector<8x1xf32>
    %59 = vector.broadcast %49 : f32 to vector<8x1xf32>
    %60 = arith.mulf %59, %57 : vector<8x1xf32>
    %61 = arith.subf %58, %60 : vector<8x1xf32>
    %62 = vector.broadcast %57 : vector<8x1xf32> to vector<8x256xf32>
    %63 = arith.mulf %39, %62 : vector<8x256xf32>
    %64 = vector.broadcast %61 : vector<8x1xf32> to vector<8x256xf32>
    %65 = arith.addf %63, %64 : vector<8x256xf32>
    %cst_60 = arith.constant 0.000000e+00 : f32
    %66 = vector.broadcast %cst_60 : f32 to vector<8x256xf32>
    %67 = arith.maximumf %65, %66 : vector<8x256xf32>
    %c0_61 = arith.constant 0 : index
    %c0_62 = arith.constant 0 : index
    %c0_63 = arith.constant 0 : index
    %68 = vector.load %arg6[%c0_61, %c0_62, %c0_63] : memref<1x8x256xf32, #tpu.memory_space<vmem>>, vector<1x8x256xf32>
    %69 = vector.shape_cast %68 : vector<1x8x256xf32> to vector<8x256xf32>
    %70 = vector.shape_cast %67 : vector<8x256xf32> to vector<1x8x256xf32>
    tpu.vector_store %arg6[%c0_61, %c0_62, %c0_63], %70 {strides = array<i32>} : memref<1x8x256xf32, #tpu.memory_space<vmem>>, vector<1x8x256xf32>,
    return
  }
  func.func @transform_0(%arg0: i32) -> (i32, i32, i32, i32) {
    %c0_i32 = arith.constant 0 : i32
    %c0_i32_0 = arith.constant 0 : i32
    %c0_i32_1 = arith.constant 0 : i32
    %c0_i32_2 = arith.constant 0 : i32
    return %arg0, %c0_i32, %c0_i32_0, %c0_i32_1 : i32, i32, i32, i32
  }
  func.func @transform_1(%arg0: i32) -> (i32, i32) {
    %c0_i32 = arith.constant 0 : i32
    %c0_i32_0 = arith.constant 0 : i32
    %c0_i32_1 = arith.constant 0 : i32
    return %c0_i32, %c0_i32_0 : i32, i32
  }
  func.func @transform_2(%arg0: i32) -> (i32, i32) {
    %c0_i32 = arith.constant 0 : i32
    %c0_i32_0 = arith.constant 0 : i32
    %c0_i32_1 = arith.constant 0 : i32
    return %c0_i32, %c0_i32_0 : i32, i32
  }
  func.func @transform_3(%arg0: i32) -> (i32, i32) {
    %c0_i32 = arith.constant 0 : i32
    %c0_i32_0 = arith.constant 0 : i32
    %c0_i32_1 = arith.constant 0 : i32
    return %c0_i32, %c0_i32_0 : i32, i32
  }
  func.func @transform_4(%arg0: i32) -> (i32, i32) {
    %c0_i32 = arith.constant 0 : i32
    %c0_i32_0 = arith.constant 0 : i32
    %c0_i32_1 = arith.constant 0 : i32
    return %c0_i32, %c0_i32_0 : i32, i32
  }
  func.func @transform_5(%arg0: i32) -> (i32, i32, i32) {
    %c0_i32 = arith.constant 0 : i32
    %c0_i32_0 = arith.constant 0 : i32
    %c0_i32_1 = arith.constant 0 : i32
    return %arg0, %c0_i32, %c0_i32_0 : i32, i32, i32
  }
}

</mosaic_0001>

<llo_original>
// kernel: tpu_custom_call.1
$region0: #{tpu_custom_call.1}
  #allocation0 [shape = 'u32[]', space=smem, size = 0x4, offset = 0x4, fixed_abs, tag = 'smem constant byte address 0x4 - core index']
  #allocation1 [shape = 'u32[144,128]{1,0:T(1,128)}', space=vmem, size = 0x12000, scoped, tag = 'internal scratch']
  #allocation2 [shape = 'f32[18,18,4]{2,1,0:T(8,128)}', space=vmem, size = 0x36000, scoped, tag = 'scratch operand']
  #allocation3 [shape = 'f32[256,36]{1,0:T(8,128)}', space=vmem, size = 0x20000, scoped, tag = 'scratch operand']
  %s0 = inlined_call_operand.vmem [shape: bf16[2,16,16,4], index: 0, kind: input, shape index: {}]
  %s1 = inlined_call_operand.vmem [shape: bf16[8,36], index: 1, kind: input, shape index: {}]
  %s2 = inlined_call_operand.vmem [shape: f32[8,1], index: 2, kind: input, shape index: {}]
  %s3 = inlined_call_operand.vmem [shape: f32[8,1], index: 3, kind: input, shape index: {}]
  %s4 = inlined_call_operand.vmem [shape: f32[8,1], index: 4, kind: input, shape index: {}]
  %s5 = inlined_call_operand.hbm [shape: f32[2,8,256], index: 5, kind: output, shape index: {}]
  %s6 = sld [smem:[#allocation0]]
  $region53: #{tpu_custom_call.1} parent=0
    _
  %s8 = ssub.s32 1, %s6
  %s9 = scalar_select 0, %s8, %s6
  $region1: #{tpu_custom_call.1} parent=0
    #allocation4 [shape = 'u8[16384]{0}', space=vmem, size = 0x4000, scoped, tag = 'output window, operand 0']
    #allocation5 [shape = 's32[2]{0}', space=sflag, size = 0x8, scoped, tag = 'scoped memory for tpu_custom_call.1']
    %10 = vsyncpa [#allocation5], 0
    %s11 = scalar_lea.sflag [#allocation5], 1
    %12 = vsyncpa %s11, 0
    loop: start=0, step=1, limit=4
    $region2: #{tpu_custom_call.1} parent=1 // loop_pre_header
      _
    $region3: #{tpu_custom_call.1} parent=1 // loop_header
      %s14 = sphi 0, %s18
      %p15 = scmp.ge.s32.totalorder %s14, 4
      %s24 = sphi 0, %s26
      %s27 = sphi 0, %s24
      %s28 = sphi 0, %s27
      %s44 = sphi 0, %s28
      %s48 = sphi 0, %s48
      %s50 = sphi 0, %s48
      %s51 = sphi 0, %s50
      %s65 = sphi 0, %s51
      %s69 = sphi 0, %s69
      %s71 = sphi 0, %s69
      %s72 = sphi 0, %s71
      %s86 = sphi 0, %s72
      %s90 = sphi 0, %s90
      %s92 = sphi 0, %s90
      %s93 = sphi 0, %s92
      %s107 = sphi 0, %s93
      %s111 = sphi 0, %s111
      %s113 = sphi 0, %s111
      %s114 = sphi 0, %s113
      %s128 = sphi 0, %s114
      %s134 = sphi 0, %s136
      %s137 = sphi 0, %s134
      %s138 = sphi 0, %s137
      %s154 = sphi 0, %s138
    $region4: #{tpu_custom_call.1} parent=1 // loop_header_branch
      %17 = sbr.rel (%p15) target = $region8
    $region5: #{tpu_custom_call.1} parent=1 // loop_body
      %s19 = ssub.s32 %s14, 1
      %s20 = ssub.s32 %s14, 2
      %s21 = sadd.s32 %s14, 1
      %s22 = ssub.s32 %s14, %s21
      %p23 = scmp.eq.s32.totalorder %s22, 0
      %s25 = sadd.s32 %s24, 1
      %s26 = scalar_select %p23, %s24, %s25
      %p29 = pneg %p23
      %p30 = scmp.eq.s32.totalorder %s14, 1
      %p31 = por %p29, %p30
      %p32 = scmp.ne.s32.totalorder %s24, %s27
      %p33 = scmp.eq.s32.totalorder %s14, 0
      %p34 = por %p32, %p33
      %p35 = scmp.ne.s32.totalorder %s24, %s27
      %p36 = scmp.eq.s32.totalorder %s19, 1
      %p37 = por %p35, %p36
      %p38 = scmp.ne.s32.totalorder %s27, %s28
      %p39 = scmp.eq.s32.totalorder %s19, 0
      %p40 = por %p38, %p39
      %p41 = scmp.ne.s32.totalorder %s27, %s28
      %p42 = scmp.eq.s32.totalorder %s20, 1
      %p43 = por %p41, %p42
      %p45 = scmp.ne.s32.totalorder %s28, %s44
      %p46 = scmp.eq.s32.totalorder %s20, 0
      %p47 = por %p45, %p46
      %s49 = sadd.s32 %s48, 1
      %p52 = scmp.eq.s32.totalorder %s14, 1
      %p53 = scmp.ne.s32.totalorder %s48, %s50
      %p54 = scmp.eq.s32.totalorder %s14, 0
      %p55 = por %p53, %p54
      %p56 = scmp.ne.s32.totalorder %s48, %s50
      %p57 = scmp.eq.s32.totalorder %s19, 1
      %p58 = por %p56, %p57
      %p59 = scmp.ne.s32.totalorder %s50, %s51
      %p60 = scmp.eq.s32.totalorder %s19, 0
      %p61 = por %p59, %p60
      %p62 = scmp.ne.s32.totalorder %s50, %s51
      %p63 = scmp.eq.s32.totalorder %s20, 1
      %p64 = por %p62, %p63
      %p66 = scmp.ne.s32.totalorder %s51, %s65
      %p67 = scmp.eq.s32.totalorder %s20, 0
      %p68 = por %p66, %p67
      %s70 = sadd.s32 %s69, 1
      %p73 = scmp.eq.s32.totalorder %s14, 1
      %p74 = scmp.ne.s32.totalorder %s69, %s71
      %p75 = scmp.eq.s32.totalorder %s14, 0
      %p76 = por %p74, %p75
      %p77 = scmp.ne.s32.totalorder %s69, %s71
      %p78 = scmp.eq.s32.totalorder %s19, 1
      %p79 = por %p77, %p78
      %p80 = scmp.ne.s32.totalorder %s71, %s72
      %p81 = scmp.eq.s32.totalorder %s19, 0
      %p82 = por %p80, %p81
      %p83 = scmp.ne.s32.totalorder %s71, %s72
      %p84 = scmp.eq.s32.totalorder %s20, 1
      %p85 = por %p83, %p84
      %p87 = scmp.ne.s32.totalorder %s72, %s86
      %p88 = scmp.eq.s32.totalorder %s20, 0
      %p89 = por %p87, %p88
      %s91 = sadd.s32 %s90, 1
      %p94 = scmp.eq.s32.totalorder %s14, 1
      %p95 = scmp.ne.s32.totalorder %s90, %s92
      %p96 = scmp.eq.s32.totalorder %s14, 0
      %p97 = por %p95, %p96
      %p98 = scmp.ne.s32.totalorder %s90, %s92
      %p99 = scmp.eq.s32.totalorder %s19, 1
      %p100 = por %p98, %p99
      %p101 = scmp.ne.s32.totalorder %s92, %s93
      %p102 = scmp.eq.s32.totalorder %s19, 0
      %p103 = por %p101, %p102
      %p104 = scmp.ne.s32.totalorder %s92, %s93
      %p105 = scmp.eq.s32.totalorder %s20, 1
      %p106 = por %p104, %p105
      %p108 = scmp.ne.s32.totalorder %s93, %s107
      %p109 = scmp.eq.s32.totalorder %s20, 0
      %p110 = por %p108, %p109
      %s112 = sadd.s32 %s111, 1
      %p115 = scmp.eq.s32.totalorder %s14, 1
      %p116 = scmp.ne.s32.totalorder %s111, %s113
      %p117 = scmp.eq.s32.totalorder %s14, 0
      %p118 = por %p116, %p117
      %p119 = scmp.ne.s32.totalorder %s111, %s113
      %p120 = scmp.eq.s32.totalorder %s19, 1
      %p121 = por %p119, %p120
      %p122 = scmp.ne.s32.totalorder %s113, %s114
      %p123 = scmp.eq.s32.totalorder %s19, 0
      %p124 = por %p122, %p123
      %p125 = scmp.ne.s32.totalorder %s113, %s114
      %p126 = scmp.eq.s32.totalorder %s20, 1
      %p127 = por %p125, %p126
      %p129 = scmp.ne.s32.totalorder %s114, %s128
      %p130 = scmp.eq.s32.totalorder %s20, 0
      %p131 = por %p129, %p130
      %s132 = ssub.s32 %s14, %s21
      %p133 = scmp.eq.s32.totalorder %s132, 0
      %s135 = sadd.s32 %s134, 1
      %s136 = scalar_select %p133, %s134, %s135
      %p139 = pneg %p133
      %p140 = scmp.eq.s32.totalorder %s14, 1
      %p141 = por %p139, %p140
      %p142 = scmp.ne.s32.totalorder %s134, %s137
      %p143 = scmp.eq.s32.totalorder %s14, 0
      %p144 = por %p142, %p143
      %p145 = scmp.ne.s32.totalorder %s134, %s137
      %p146 = scmp.eq.s32.totalorder %s19, 1
      %p147 = por %p145, %p146
      %p148 = scmp.ne.s32.totalorder %s137, %s138
      %p149 = scmp.eq.s32.totalorder %s19, 0
      %p150 = por %p148, %p149
      %p151 = scmp.ne.s32.totalorder %s137, %s138
      %p152 = scmp.eq.s32.totalorder %s20, 1
      %p153 = por %p151, %p152
      %p155 = scmp.ne.s32.totalorder %s138, %s154
      %p156 = scmp.eq.s32.totalorder %s20, 0
      %p157 = por %p155, %p156
      %p158 = scmp.le.s32.totalorder 1, %s14
      %p159 = scmp.lt.s32.totalorder %s14, 3
      %p160 = pnand %p158, %p159
      %p161 = pneg %p160
      // Predicated region
      $region9: #{tpu_custom_call.1} parent=5 // pred_check
        _
      $region10: #{tpu_custom_call.1} parent=5 // pred_check_branch
        %163 = sbr.rel (%p160) target = $region12
      $region11: #{tpu_custom_call.1} parent=5 // pred_region
        %s164 = ssub.s32 %s14, 1
        // Predicated region
        $region13: #{tpu_custom_call.1} parent=11 // pred_check
          %p165 = pneg %p61
        $region14: #{tpu_custom_call.1} parent=11 // pred_check_branch
          %167 = sbr.rel (%p165) target = $region16
        $region15: #{tpu_custom_call.1} parent=11 // pred_region
          _
        $region16: #{tpu_custom_call.1} parent=11 // pred_fallthru
          _
        // Predicated region
        $region17: #{tpu_custom_call.1} parent=11 // pred_check
          %p168 = pneg %p82
        $region18: #{tpu_custom_call.1} parent=11 // pred_check_branch
          %170 = sbr.rel (%p168) target = $region20
        $region19: #{tpu_custom_call.1} parent=11 // pred_region
          _
        $region20: #{tpu_custom_call.1} parent=11 // pred_fallthru
          _
        // Predicated region
        $region21: #{tpu_custom_call.1} parent=11 // pred_check
          %p171 = pneg %p103
        $region22: #{tpu_custom_call.1} parent=11 // pred_check_branch
          %173 = sbr.rel (%p171) target = $region24
        $region23: #{tpu_custom_call.1} parent=11 // pred_region
          _
        $region24: #{tpu_custom_call.1} parent=11 // pred_fallthru
          _
        // Predicated region
        $region25: #{tpu_custom_call.1} parent=11 // pred_check
          %p174 = pneg %p124
        $region26: #{tpu_custom_call.1} parent=11 // pred_check_branch
          %176 = sbr.rel (%p174) target = $region28
        $region27: #{tpu_custom_call.1} parent=11 // pred_region
          _
        $region28: #{tpu_custom_call.1} parent=11 // pred_fallthru
          _
      $region12: #{tpu_custom_call.1} parent=5 // pred_fallthru
        _
      %p177 = scmp.lt.s32.totalorder %s14, 2
      // Predicated region
      $region29: #{tpu_custom_call.1} parent=5 // pred_check
        %p178 = pneg %p177
      $region30: #{tpu_custom_call.1} parent=5 // pred_check_branch
        %180 = sbr.rel (%p178) target = $region32
      $region31: #{tpu_custom_call.1} parent=5 // pred_region
        // Predicated region
        $region33: #{tpu_custom_call.1} parent=31 // pred_check
          %p181 = pneg %p34
        $region34: #{tpu_custom_call.1} parent=31 // pred_check_branch
          %183 = sbr.rel (%p181) target = $region36
        $region35: #{tpu_custom_call.1} parent=31 // pred_region
          %p184 = scmp.lt.s32.totalorder %s14, 1
          %s185 = scalar_select %p184, %s14, 1
          %s186 = smul.addr %s185, 32
          %s187 = smul.addr %s186, 4
          %s188 = scalar_lea.vmem %s0, %s187
        $region36: #{tpu_custom_call.1} parent=31 // pred_fallthru
          _
      $region32: #{tpu_custom_call.1} parent=5 // pred_fallthru
        _
      %p189 = scmp.le.s32.totalorder 1, %s14
      %p190 = scmp.lt.s32.totalorder %s14, 3
      %p191 = pnand %p189, %p190
      %p192 = pneg %p191
      // Predicated region
      $region37: #{tpu_custom_call.1} parent=5 // pred_check
        _
      $region38: #{tpu_custom_call.1} parent=5 // pred_check_branch
        %194 = sbr.rel (%p191) target = $region40
      $region39: #{tpu_custom_call.1} parent=5 // pred_region
        %s195 = ssub.s32 %s14, 1
        %p196 = scmp.lt.s32.totalorder %s19, 1
        %s197 = scalar_select %p196, %s19, 1
        %s198 = smul.addr %s197, 32
        %s199 = smul.addr %s198, 4
        %s200 = scalar_lea.vmem %s0, %s199
        %p201 = pneg %p40
        %p202 = pneg %p37
        %p203 = pneg %p61
        %p204 = pneg %p58
        %p205 = pneg %p82
        %p206 = pneg %p79
        %p207 = pneg %p103
        %p208 = pneg %p100
        %p209 = pneg %p124
        %p210 = pneg %p121
        %p211 = pneg %p150
        %p212 = pneg %p147
        %s213 = sand.u32 %s137, 1
        %s214 = scalar_lea.sflag [#allocation5], %s213
        %s215 = sand.u32 %s137, 1
        %s216 = smul.addr %s215, 16
        %s217 = scalar_lea.vmem [#allocation4], %s216
        %p218 = scmp.lt.s32.totalorder %s19, 1
        %s219 = scalar_select %p218, %s19, 1
        %s220 = smul.addr %s219, 32
        %s221 = smul.addr %s220, 4
        %s222 = scalar_lea.vmem %s0, %s221
        %vm224 = vcmask 31744
        %225 = vst.msk [vmem:[#allocation2] sm:$0xff] %vm224, 0.0
        %226 = vst.msk [vmem:[#allocation2 + $0x8] sm:$0xff] %vm224, 0.0
        %vm227 = vcmask 25600
        %228 = vst.msk [vmem:[#allocation2 + $0x10] sm:$0x3] %vm227, 0.0
        %229 = vst.msk [vmem:[#allocation2 + $0x18] sm:$0xff] %vm224, 0.0
        %230 = vst.msk [vmem:[#allocation2 + $0x20] sm:$0xff] %vm224, 0.0
        %231 = vst.msk [vmem:[#allocation2 + $0x28] sm:$0x3] %vm227, 0.0
        %232 = vst.msk [vmem:[#allocation2 + $0x30] sm:$0xff] %vm224, 0.0
        %233 = vst.msk [vmem:[#allocation2 + $0x38] sm:$0xff] %vm224, 0.0
        %234 = vst.msk [vmem:[#allocation2 + $0x40] sm:$0x3] %vm227, 0.0
        %235 = vst.msk [vmem:[#allocation2 + $0x48] sm:$0xff] %vm224, 0.0
        %236 = vst.msk [vmem:[#allocation2 + $0x50] sm:$0xff] %vm224, 0.0
        %237 = vst.msk [vmem:[#allocation2 + $0x58] sm:$0x3] %vm227, 0.0
        %238 = vst.msk [vmem:[#allocation2 + $0x60] sm:$0xff] %vm224, 0.0
        %239 = vst.msk [vmem:[#allocation2 + $0x68] sm:$0xff] %vm224, 0.0
        %240 = vst.msk [vmem:[#allocation2 + $0x70] sm:$0x3] %vm227, 0.0
        %241 = vst.msk [vmem:[#allocation2 + $0x78] sm:$0xff] %vm224, 0.0
        %242 = vst.msk [vmem:[#allocation2 + $0x80] sm:$0xff] %vm224, 0.0
        %243 = vst.msk [vmem:[#allocation2 + $0x88] sm:$0x3] %vm227, 0.0
        %244 = vst.msk [vmem:[#allocation2 + $0x90] sm:$0xff] %vm224, 0.0
        %245 = vst.msk [vmem:[#allocation2 + $0x98] sm:$0xff] %vm224, 0.0
        %246 = vst.msk [vmem:[#allocation2 + $0xa0] sm:$0x3] %vm227, 0.0
        %247 = vst.msk [vmem:[#allocation2 + $0xa8] sm:$0xff] %vm224, 0.0
        %248 = vst.msk [vmem:[#allocation2 + $0xb0] sm:$0xff] %vm224, 0.0
        %249 = vst.msk [vmem:[#allocation2 + $0xb8] sm:$0x3] %vm227, 0.0
        %250 = vst.msk [vmem:[#allocation2 + $0xc0] sm:$0xff] %vm224, 0.0
        %251 = vst.msk [vmem:[#allocation2 + $0xc8] sm:$0xff] %vm224, 0.0
        %252 = vst.msk [vmem:[#allocation2 + $0xd0] sm:$0x3] %vm227, 0.0
        %253 = vst.msk [vmem:[#allocation2 + $0xd8] sm:$0xff] %vm224, 0.0
        %254 = vst.msk [vmem:[#allocation2 + $0xe0] sm:$0xff] %vm224, 0.0
        %255 = vst.msk [vmem:[#allocation2 + $0xe8] sm:$0x3] %vm227, 0.0
        %256 = vst.msk [vmem:[#allocation2 + $0xf0] sm:$0xff] %vm224, 0.0
        %257 = vst.msk [vmem:[#allocation2 + $0xf8] sm:$0xff] %vm224, 0.0
        %258 = vst.msk [vmem:[#allocation2 + $0x100] sm:$0x3] %vm227, 0.0
        %259 = vst.msk [vmem:[#allocation2 + $0x108] sm:$0xff] %vm224, 0.0
        %260 = vst.msk [vmem:[#allocation2 + $0x110] sm:$0xff] %vm224, 0.0
        %261 = vst.msk [vmem:[#allocation2 + $0x118] sm:$0x3] %vm227, 0.0
        %262 = vst.msk [vmem:[#allocation2 + $0x120] sm:$0xff] %vm224, 0.0
        %263 = vst.msk [vmem:[#allocation2 + $0x128] sm:$0xff] %vm224, 0.0
        %264 = vst.msk [vmem:[#allocation2 + $0x130] sm:$0x3] %vm227, 0.0
        %265 = vst.msk [vmem:[#allocation2 + $0x138] sm:$0xff] %vm224, 0.0
        %266 = vst.msk [vmem:[#allocation2 + $0x140] sm:$0xff] %vm224, 0.0
        %267 = vst.msk [vmem:[#allocation2 + $0x148] sm:$0x3] %vm227, 0.0
        %268 = vst.msk [vmem:[#allocation2 + $0x150] sm:$0xff] %vm224, 0.0
        %269 = vst.msk [vmem:[#allocation2 + $0x158] sm:$0xff] %vm224, 0.0
        %270 = vst.msk [vmem:[#allocation2 + $0x160] sm:$0x3] %vm227, 0.0
        %271 = vst.msk [vmem:[#allocation2 + $0x168] sm:$0xff] %vm224, 0.0
        %272 = vst.msk [vmem:[#allocation2 + $0x170] sm:$0xff] %vm224, 0.0
        %273 = vst.msk [vmem:[#allocation2 + $0x178] sm:$0x3] %vm227, 0.0
        %274 = vst.msk [vmem:[#allocation2 + $0x180] sm:$0xff] %vm224, 0.0
        %275 = vst.msk [vmem:[#allocation2 + $0x188] sm:$0xff] %vm224, 0.0
        %276 = vst.msk [vmem:[#allocation2 + $0x190] sm:$0x3] %vm227, 0.0
        %277 = vst.msk [vmem:[#allocation2 + $0x198] sm:$0xff] %vm224, 0.0
        %278 = vst.msk [vmem:[#allocation2 + $0x1a0] sm:$0xff] %vm224, 0.0
        %279 = vst.msk [vmem:[#allocation2 + $0x1a8] sm:$0x3] %vm227, 0.0
        %v280 = vld [vmem:[%s222] sm:$0xf]
        %v281 = vld [vmem:[%s222 + $0x4] sm:$0xf]
        %v282 = vld [vmem:[%s222 + $0x8] sm:$0xf]
        %v283 = vld [vmem:[%s222 + $0xc] sm:$0xf]
        %v284 = vld [vmem:[%s222 + $0x10] sm:$0xf]
        %v285 = vld [vmem:[%s222 + $0x14] sm:$0xf]
        %v286 = vld [vmem:[%s222 + $0x18] sm:$0xf]
        %v287 = vld [vmem:[%s222 + $0x1c] sm:$0xf]
        %v288 = vld [vmem:[%s222 + $0x20] sm:$0xf]
        %v289 = vld [vmem:[%s222 + $0x24] sm:$0xf]
        %v290 = vld [vmem:[%s222 + $0x28] sm:$0xf]
        %v291 = vld [vmem:[%s222 + $0x2c] sm:$0xf]
        %v292 = vld [vmem:[%s222 + $0x30] sm:$0xf]
        %v293 = vld [vmem:[%s222 + $0x34] sm:$0xf]
        %v294 = vld [vmem:[%s222 + $0x38] sm:$0xf]
        %v295 = vld [vmem:[%s222 + $0x3c] sm:$0xf]
        %v296 = vld [vmem:[%s222 + $0x40] sm:$0xf]
        %v297 = vld [vmem:[%s222 + $0x44] sm:$0xf]
        %v298 = vld [vmem:[%s222 + $0x48] sm:$0xf]
        %v299 = vld [vmem:[%s222 + $0x4c] sm:$0xf]
        %v300 = vld [vmem:[%s222 + $0x50] sm:$0xf]
        %v301 = vld [vmem:[%s222 + $0x54] sm:$0xf]
        %v302 = vld [vmem:[%s222 + $0x58] sm:$0xf]
        %v303 = vld [vmem:[%s222 + $0x5c] sm:$0xf]
        %v304 = vld [vmem:[%s222 + $0x60] sm:$0xf]
        %v305 = vld [vmem:[%s222 + $0x64] sm:$0xf]
        %v306 = vld [vmem:[%s222 + $0x68] sm:$0xf]
        %v307 = vld [vmem:[%s222 + $0x6c] sm:$0xf]
        %v308 = vld [vmem:[%s222 + $0x70] sm:$0xf]
        %v309 = vld [vmem:[%s222 + $0x74] sm:$0xf]
        %v310 = vld [vmem:[%s222 + $0x78] sm:$0xf]
        %v311 = vld [vmem:[%s222 + $0x7c] sm:$0xf]
        %v312 = vunpack.c.l.bf16 %v280
        %v313 = vunpack.c.l.bf16 %v281
        %v314 = vunpack.c.l.bf16 %v282
        %v315 = vunpack.c.l.bf16 %v283
        %v316 = vunpack.c.l.bf16 %v284
        %v317 = vunpack.c.l.bf16 %v285
        %v318 = vunpack.c.l.bf16 %v286
        %v319 = vunpack.c.l.bf16 %v287
        %v320 = vunpack.c.l.bf16 %v288
        %v321 = vunpack.c.l.bf16 %v289
        %v322 = vunpack.c.l.bf16 %v290
        %v323 = vunpack.c.l.bf16 %v291
        %v324 = vunpack.c.l.bf16 %v292
        %v325 = vunpack.c.l.bf16 %v293
        %v326 = vunpack.c.l.bf16 %v294
        %v327 = vunpack.c.l.bf16 %v295
        %v328 = vunpack.c.l.bf16 %v296
        %v329 = vunpack.c.l.bf16 %v297
        %v330 = vunpack.c.l.bf16 %v298
        %v331 = vunpack.c.l.bf16 %v299
        %v332 = vunpack.c.l.bf16 %v300
        %v333 = vunpack.c.l.bf16 %v301
        %v334 = vunpack.c.l.bf16 %v302
        %v335 = vunpack.c.l.bf16 %v303
        %v336 = vunpack.c.l.bf16 %v304
        %v337 = vunpack.c.l.bf16 %v305
        %v338 = vunpack.c.l.bf16 %v306
        %v339 = vunpack.c.l.bf16 %v307
        %v340 = vunpack.c.l.bf16 %v308
        %v341 = vunpack.c.l.bf16 %v309
        %v342 = vunpack.c.l.bf16 %v310
        %v343 = vunpack.c.l.bf16 %v311
        %s344 = scalar_lea.vmem [#allocation2], 24
        %345 = vst.msk [vmem:[%s344 + $0x1] sm:$0xff] %vm224, %v312
        %346 = vst.msk [vmem:[%s344 + $0x9] sm:$0xff] %vm224, %v313
        %347 = vst.msk [vmem:[%s344 + $0x19] sm:$0xff] %vm224, %v314
        %348 = vst.msk [vmem:[%s344 + $0x21] sm:$0xff] %vm224, %v315
        %349 = vst.msk [vmem:[%s344 + $0x31] sm:$0xff] %vm224, %v316
        %350 = vst.msk [vmem:[%s344 + $0x39] sm:$0xff] %vm224, %v317
        %351 = vst.msk [vmem:[%s344 + $0x49] sm:$0xff] %vm224, %v318
        %352 = vst.msk [vmem:[%s344 + $0x51] sm:$0xff] %vm224, %v319
        %353 = vst.msk [vmem:[%s344 + $0x61] sm:$0xff] %vm224, %v320
        %354 = vst.msk [vmem:[%s344 + $0x69] sm:$0xff] %vm224, %v321
        %355 = vst.msk [vmem:[%s344 + $0x79] sm:$0xff] %vm224, %v322
        %356 = vst.msk [vmem:[%s344 + $0x81] sm:$0xff] %vm224, %v323
        %357 = vst.msk [vmem:[%s344 + $0x91] sm:$0xff] %vm224, %v324
        %358 = vst.msk [vmem:[%s344 + $0x99] sm:$0xff] %vm224, %v325
        %359 = vst.msk [vmem:[%s344 + $0xa9] sm:$0xff] %vm224, %v326
        %360 = vst.msk [vmem:[%s344 + $0xb1] sm:$0xff] %vm224, %v327
        %361 = vst.msk [vmem:[%s344 + $0xc1] sm:$0xff] %vm224, %v328
        %362 = vst.msk [vmem:[%s344 + $0xc9] sm:$0xff] %vm224, %v329
        %363 = vst.msk [vmem:[%s344 + $0xd9] sm:$0xff] %vm224, %v330
        %364 = vst.msk [vmem:[%s344 + $0xe1] sm:$0xff] %vm224, %v331
        %365 = vst.msk [vmem:[%s344 + $0xf1] sm:$0xff] %vm224, %v332
        %366 = vst.msk [vmem:[%s344 + $0xf9] sm:$0xff] %vm224, %v333
        %367 = vst.msk [vmem:[%s344 + $0x109] sm:$0xff] %vm224, %v334
        %368 = vst.msk [vmem:[%s344 + $0x111] sm:$0xff] %vm224, %v335
        %369 = vst.msk [vmem:[%s344 + $0x121] sm:$0xff] %vm224, %v336
        %370 = vst.msk [vmem:[%s344 + $0x129] sm:$0xff] %vm224, %v337
        %371 = vst.msk [vmem:[%s344 + $0x139] sm:$0xff] %vm224, %v338
        %372 = vst.msk [vmem:[%s344 + $0x141] sm:$0xff] %vm224, %v339
        %373 = vst.msk [vmem:[%s344 + $0x151] sm:$0xff] %vm224, %v340
        %374 = vst.msk [vmem:[%s344 + $0x159] sm:$0xff] %vm224, %v341
        %375 = vst.msk [vmem:[%s344 + $0x169] sm:$0xff] %vm224, %v342
        %376 = vst.msk [vmem:[%s344 + $0x171] sm:$0xff] %vm224, %v343
        %v377 = vld [vmem:[#allocation2] sm:$0xff]
        %v378 = vld [vmem:[#allocation2 + $0x8] sm:$0xff]
        %v379 = vld [vmem:[#allocation2 + $0x18] sm:$0xff]
        %v380 = vld [vmem:[#allocation2 + $0x20] sm:$0xff]
        %v381 = vld [vmem:[#allocation2 + $0x30] sm:$0xff]
        %v382 = vld [vmem:[#allocation2 + $0x38] sm:$0xff]
        %v383 = vld [vmem:[#allocation2 + $0x48] sm:$0xff]
        %v384 = vld [vmem:[#allocation2 + $0x50] sm:$0xff]
        %v385 = vld [vmem:[#allocation2 + $0x60] sm:$0xff]
        %v386 = vld [vmem:[#allocation2 + $0x68] sm:$0xff]
        %v387 = vld [vmem:[#allocation2 + $0x78] sm:$0xff]
        %v388 = vld [vmem:[#allocation2 + $0x80] sm:$0xff]
        %v389 = vld [vmem:[#allocation2 + $0x90] sm:$0xff]
        %v390 = vld [vmem:[#allocation2 + $0x98] sm:$0xff]
        %v391 = vld [vmem:[#allocation2 + $0xa8] sm:$0xff]
        %v392 = vld [vmem:[#allocation2 + $0xb0] sm:$0xff]
        %v393 = vld [vmem:[#allocation2 + $0xc0] sm:$0xff]
        %v394 = vld [vmem:[#allocation2 + $0xc8] sm:$0xff]
        %v395 = vld [vmem:[#allocation2 + $0xd8] sm:$0xff]
        %v396 = vld [vmem:[#allocation2 + $0xe0] sm:$0xff]
        %v397 = vld [vmem:[#allocation2 + $0xf0] sm:$0xff]
        %v398 = vld [vmem:[#allocation2 + $0xf8] sm:$0xff]
        %v399 = vld [vmem:[#allocation2 + $0x108] sm:$0xff]
        %v400 = vld [vmem:[#allocation2 + $0x110] sm:$0xff]
        %v401 = vld [vmem:[#allocation2 + $0x120] sm:$0xff]
        %v402 = vld [vmem:[#allocation2 + $0x128] sm:$0xff]
        %v403 = vld [vmem:[#allocation2 + $0x138] sm:$0xff]
        %v404 = vld [vmem:[#allocation2 + $0x140] sm:$0xff]
        %v405 = vld [vmem:[#allocation2 + $0x150] sm:$0xff]
        %v406 = vld [vmem:[#allocation2 + $0x158] sm:$0xff]
        %v407 = vld [vmem:[#allocation2 + $0x168] sm:$0xff]
        %v408 = vld [vmem:[#allocation2 + $0x170] sm:$0xff]
        %409 = vst.msk [vmem:[#allocation3] sm:$0xff] %vm224, %v377
        %410 = vst.msk [vmem:[#allocation3 + $0x8] sm:$0xff] %vm224, %v378
        %411 = vst.msk [vmem:[#allocation3 + $0x10] sm:$0xff] %vm224, %v379
        %412 = vst.msk [vmem:[#allocation3 + $0x18] sm:$0xff] %vm224, %v380
        %413 = vst.msk [vmem:[#allocation3 + $0x20] sm:$0xff] %vm224, %v381
        %414 = vst.msk [vmem:[#allocation3 + $0x28] sm:$0xff] %vm224, %v382
        %415 = vst.msk [vmem:[#allocation3 + $0x30] sm:$0xff] %vm224, %v383
        %416 = vst.msk [vmem:[#allocation3 + $0x38] sm:$0xff] %vm224, %v384
        %417 = vst.msk [vmem:[#allocation3 + $0x40] sm:$0xff] %vm224, %v385
        %418 = vst.msk [vmem:[#allocation3 + $0x48] sm:$0xff] %vm224, %v386
        %419 = vst.msk [vmem:[#allocation3 + $0x50] sm:$0xff] %vm224, %v387
        %420 = vst.msk [vmem:[#allocation3 + $0x58] sm:$0xff] %vm224, %v388
        %421 = vst.msk [vmem:[#allocation3 + $0x60] sm:$0xff] %vm224, %v389
        %422 = vst.msk [vmem:[#allocation3 + $0x68] sm:$0xff] %vm224, %v390
        %423 = vst.msk [vmem:[#allocation3 + $0x70] sm:$0xff] %vm224, %v391
        %424 = vst.msk [vmem:[#allocation3 + $0x78] sm:$0xff] %vm224, %v392
        %425 = vst.msk [vmem:[#allocation3 + $0x80] sm:$0xff] %vm224, %v393
        %426 = vst.msk [vmem:[#allocation3 + $0x88] sm:$0xff] %vm224, %v394
        %427 = vst.msk [vmem:[#allocation3 + $0x90] sm:$0xff] %vm224, %v395
        %428 = vst.msk [vmem:[#allocation3 + $0x98] sm:$0xff] %vm224, %v396
        %429 = vst.msk [vmem:[#allocation3 + $0xa0] sm:$0xff] %vm224, %v397
        %430 = vst.msk [vmem:[#allocation3 + $0xa8] sm:$0xff] %vm224, %v398
        %431 = vst.msk [vmem:[#allocation3 + $0xb0] sm:$0xff] %vm224, %v399
        %432 = vst.msk [vmem:[#allocation3 + $0xb8] sm:$0xff] %vm224, %v400
        %433 = vst.msk [vmem:[#allocation3 + $0xc0] sm:$0xff] %vm224, %v401
        %434 = vst.msk [vmem:[#allocation3 + $0xc8] sm:$0xff] %vm224, %v402
        %435 = vst.msk [vmem:[#allocation3 + $0xd0] sm:$0xff] %vm224, %v403
        %436 = vst.msk [vmem:[#allocation3 + $0xd8] sm:$0xff] %vm224, %v404
        %437 = vst.msk [vmem:[#allocation3 + $0xe0] sm:$0xff] %vm224, %v405
        %438 = vst.msk [vmem:[#allocation3 + $0xe8] sm:$0xff] %vm224, %v406
        %439 = vst.msk [vmem:[#allocation3 + $0xf0] sm:$0xff] %vm224, %v407
        %440 = vst.msk [vmem:[#allocation3 + $0xf8] sm:$0xff] %vm224, %v408
        %v441 = vld [vmem:[#allocation2 + $0x1] sm:$0xff]
        %v442 = vld [vmem:[#allocation2 + $0x9] sm:$0xff]
        %v443 = vld [vmem:[#allocation2 + $0x19] sm:$0xff]
        %v444 = vld [vmem:[#allocation2 + $0x21] sm:$0xff]
        %v445 = vld [vmem:[#allocation2 + $0x31] sm:$0xff]
        %v446 = vld [vmem:[#allocation2 + $0x39] sm:$0xff]
        %v447 = vld [vmem:[#allocation2 + $0x49] sm:$0xff]
        %v448 = vld [vmem:[#allocation2 + $0x51] sm:$0xff]
        %v449 = vld [vmem:[#allocation2 + $0x61] sm:$0xff]
        %v450 = vld [vmem:[#allocation2 + $0x69] sm:$0xff]
        %v451 = vld [vmem:[#allocation2 + $0x79] sm:$0xff]
        %v452 = vld [vmem:[#allocation2 + $0x81] sm:$0xff]
        %v453 = vld [vmem:[#allocation2 + $0x91] sm:$0xff]
        %v454 = vld [vmem:[#allocation2 + $0x99] sm:$0xff]
        %v455 = vld [vmem:[#allocation2 + $0xa9] sm:$0xff]
        %v456 = vld [vmem:[#allocation2 + $0xb1] sm:$0xff]
        %v457 = vld [vmem:[#allocation2 + $0xc1] sm:$0xff]
        %v458 = vld [vmem:[#allocation2 + $0xc9] sm:$0xff]
        %v459 = vld [vmem:[#allocation2 + $0xd9] sm:$0xff]
        %v460 = vld [vmem:[#allocation2 + $0xe1] sm:$0xff]
        %v461 = vld [vmem:[#allocation2 + $0xf1] sm:$0xff]
        %v462 = vld [vmem:[#allocation2 + $0xf9] sm:$0xff]
        %v463 = vld [vmem:[#allocation2 + $0x109] sm:$0xff]
        %v464 = vld [vmem:[#allocation2 + $0x111] sm:$0xff]
        %v465 = vld [vmem:[#allocation2 + $0x121] sm:$0xff]
        %v466 = vld [vmem:[#allocation2 + $0x129] sm:$0xff]
        %v467 = vld [vmem:[#allocation2 + $0x139] sm:$0xff]
        %v468 = vld [vmem:[#allocation2 + $0x141] sm:$0xff]
        %v469 = vld [vmem:[#allocation2 + $0x151] sm:$0xff]
        %v470 = vld [vmem:[#allocation2 + $0x159] sm:$0xff]
        %v471 = vld [vmem:[#allocation2 + $0x169] sm:$0xff]
        %v472 = vld [vmem:[#allocation2 + $0x171] sm:$0xff]
        %505 = vrot.lane.b32.xlu0 %v441, 4
        %v506 = vpop.permute.xlu0 %505
        %507 = vrot.lane.b32.xlu0 %v442, 4
        %v508 = vpop.permute.xlu0 %507
        %509 = vrot.lane.b32.xlu0 %v443, 4
        %v510 = vpop.permute.xlu0 %509
        %511 = vrot.lane.b32.xlu0 %v444, 4
        %v512 = vpop.permute.xlu0 %511
        %513 = vrot.lane.b32.xlu0 %v445, 4
        %v514 = vpop.permute.xlu0 %513
        %515 = vrot.lane.b32.xlu0 %v446, 4
        %v516 = vpop.permute.xlu0 %515
        %517 = vrot.lane.b32.xlu0 %v447, 4
        %v518 = vpop.permute.xlu0 %517
        %519 = vrot.lane.b32.xlu0 %v448, 4
        %v520 = vpop.permute.xlu0 %519
        %521 = vrot.lane.b32.xlu0 %v449, 4
        %v522 = vpop.permute.xlu0 %521
        %523 = vrot.lane.b32.xlu0 %v450, 4
        %v524 = vpop.permute.xlu0 %523
        %525 = vrot.lane.b32.xlu0 %v451, 4
        %v526 = vpop.permute.xlu0 %525
        %527 = vrot.lane.b32.xlu0 %v452, 4
        %v528 = vpop.permute.xlu0 %527
        %529 = vrot.lane.b32.xlu0 %v453, 4
        %v530 = vpop.permute.xlu0 %529
        %531 = vrot.lane.b32.xlu0 %v454, 4
        %v532 = vpop.permute.xlu0 %531
        %533 = vrot.lane.b32.xlu0 %v455, 4
        %v534 = vpop.permute.xlu0 %533
        %535 = vrot.lane.b32.xlu0 %v456, 4
        %v536 = vpop.permute.xlu0 %535
        %537 = vrot.lane.b32.xlu0 %v457, 4
        %v538 = vpop.permute.xlu0 %537
        %539 = vrot.lane.b32.xlu0 %v458, 4
        %v540 = vpop.permute.xlu0 %539
        %541 = vrot.lane.b32.xlu0 %v459, 4
        %v542 = vpop.permute.xlu0 %541
        %543 = vrot.lane.b32.xlu0 %v460, 4
        %v544 = vpop.permute.xlu0 %543
        %545 = vrot.lane.b32.xlu0 %v461, 4
        %v546 = vpop.permute.xlu0 %545
        %547 = vrot.lane.b32.xlu0 %v462, 4
        %v548 = vpop.permute.xlu0 %547
        %549 = vrot.lane.b32.xlu0 %v463, 4
        %v550 = vpop.permute.xlu0 %549
        %551 = vrot.lane.b32.xlu0 %v464, 4
        %v552 = vpop.permute.xlu0 %551
        %553 = vrot.lane.b32.xlu0 %v465, 4
        %v554 = vpop.permute.xlu0 %553
        %555 = vrot.lane.b32.xlu0 %v466, 4
        %v556 = vpop.permute.xlu0 %555
        %557 = vrot.lane.b32.xlu0 %v467, 4
        %v558 = vpop.permute.xlu0 %557
        %559 = vrot.lane.b32.xlu0 %v468, 4
        %v560 = vpop.permute.xlu0 %559
        %561 = vrot.lane.b32.xlu0 %v469, 4
        %v562 = vpop.permute.xlu0 %561
        %563 = vrot.lane.b32.xlu0 %v470, 4
        %v564 = vpop.permute.xlu0 %563
        %565 = vrot.lane.b32.xlu0 %v471, 4
        %v566 = vpop.permute.xlu0 %565
        %567 = vrot.lane.b32.xlu0 %v472, 4
        %v568 = vpop.permute.xlu0 %567
        %vm601 = vcmask 64544
        %602 = vst.msk [vmem:[#allocation3] sm:$0xff] %vm601, %v506
        %603 = vst.msk [vmem:[#allocation3 + $0x8] sm:$0xff] %vm601, %v508
        %604 = vst.msk [vmem:[#allocation3 + $0x10] sm:$0xff] %vm601, %v510
        %605 = vst.msk [vmem:[#allocation3 + $0x18] sm:$0xff] %vm601, %v512
        %606 = vst.msk [vmem:[#allocation3 + $0x20] sm:$0xff] %vm601, %v514
        %607 = vst.msk [vmem:[#allocation3 + $0x28] sm:$0xff] %vm601, %v516
        %608 = vst.msk [vmem:[#allocation3 + $0x30] sm:$0xff] %vm601, %v518
        %609 = vst.msk [vmem:[#allocation3 + $0x38] sm:$0xff] %vm601, %v520
        %610 = vst.msk [vmem:[#allocation3 + $0x40] sm:$0xff] %vm601, %v522
        %611 = vst.msk [vmem:[#allocation3 + $0x48] sm:$0xff] %vm601, %v524
        %612 = vst.msk [vmem:[#allocation3 + $0x50] sm:$0xff] %vm601, %v526
        %613 = vst.msk [vmem:[#allocation3 + $0x58] sm:$0xff] %vm601, %v528
        %614 = vst.msk [vmem:[#allocation3 + $0x60] sm:$0xff] %vm601, %v530
        %615 = vst.msk [vmem:[#allocation3 + $0x68] sm:$0xff] %vm601, %v532
        %616 = vst.msk [vmem:[#allocation3 + $0x70] sm:$0xff] %vm601, %v534
        %617 = vst.msk [vmem:[#allocation3 + $0x78] sm:$0xff] %vm601, %v536
        %618 = vst.msk [vmem:[#allocation3 + $0x80] sm:$0xff] %vm601, %v538
        %619 = vst.msk [vmem:[#allocation3 + $0x88] sm:$0xff] %vm601, %v540
        %620 = vst.msk [vmem:[#allocation3 + $0x90] sm:$0xff] %vm601, %v542
        %621 = vst.msk [vmem:[#allocation3 + $0x98] sm:$0xff] %vm601, %v544
        %622 = vst.msk [vmem:[#allocation3 + $0xa0] sm:$0xff] %vm601, %v546
        %623 = vst.msk [vmem:[#allocation3 + $0xa8] sm:$0xff] %vm601, %v548
        %624 = vst.msk [vmem:[#allocation3 + $0xb0] sm:$0xff] %vm601, %v550
        %625 = vst.msk [vmem:[#allocation3 + $0xb8] sm:$0xff] %vm601, %v552
        %626 = vst.msk [vmem:[#allocation3 + $0xc0] sm:$0xff] %vm601, %v554
        %627 = vst.msk [vmem:[#allocation3 + $0xc8] sm:$0xff] %vm601, %v556
        %628 = vst.msk [vmem:[#allocation3 + $0xd0] sm:$0xff] %vm601, %v558
        %629 = vst.msk [vmem:[#allocation3 + $0xd8] sm:$0xff] %vm601, %v560
        %630 = vst.msk [vmem:[#allocation3 + $0xe0] sm:$0xff] %vm601, %v562
        %631 = vst.msk [vmem:[#allocation3 + $0xe8] sm:$0xff] %vm601, %v564
        %632 = vst.msk [vmem:[#allocation3 + $0xf0] sm:$0xff] %vm601, %v566
        %633 = vst.msk [vmem:[#allocation3 + $0xf8] sm:$0xff] %vm601, %v568
        %v634 = vld [vmem:[#allocation2 + $0x2] sm:$0xff]
        %v635 = vld [vmem:[#allocation2 + $0xa] sm:$0xff]
        %v636 = vld [vmem:[#allocation2 + $0x1a] sm:$0xff]
        %v637 = vld [vmem:[#allocation2 + $0x22] sm:$0xff]
        %v638 = vld [vmem:[#allocation2 + $0x32] sm:$0xff]
        %v639 = vld [vmem:[#allocation2 + $0x3a] sm:$0xff]
        %v640 = vld [vmem:[#allocation2 + $0x4a] sm:$0xff]
        %v641 = vld [vmem:[#allocation2 + $0x52] sm:$0xff]
        %v642 = vld [vmem:[#allocation2 + $0x62] sm:$0xff]
        %v643 = vld [vmem:[#allocation2 + $0x6a] sm:$0xff]
        %v644 = vld [vmem:[#allocation2 + $0x7a] sm:$0xff]
        %v645 = vld [vmem:[#allocation2 + $0x82] sm:$0xff]
        %v646 = vld [vmem:[#allocation2 + $0x92] sm:$0xff]
        %v647 = vld [vmem:[#allocation2 + $0x9a] sm:$0xff]
        %v648 = vld [vmem:[#allocation2 + $0xaa] sm:$0xff]
        %v649 = vld [vmem:[#allocation2 + $0xb2] sm:$0xff]
        %v650 = vld [vmem:[#allocation2 + $0xc2] sm:$0xff]
        %v651 = vld [vmem:[#allocation2 + $0xca] sm:$0xff]
        %v652 = vld [vmem:[#allocation2 + $0xda] sm:$0xff]
        %v653 = vld [vmem:[#allocation2 + $0xe2] sm:$0xff]
        %v654 = vld [vmem:[#allocation2 + $0xf2] sm:$0xff]
        %v655 = vld [vmem:[#allocation2 + $0xfa] sm:$0xff]
        %v656 = vld [vmem:[#allocation2 + $0x10a] sm:$0xff]
        %v657 = vld [vmem:[#allocation2 + $0x112] sm:$0xff]
        %v658 = vld [vmem:[#allocation2 + $0x122] sm:$0xff]
        %v659 = vld [vmem:[#allocation2 + $0x12a] sm:$0xff]
        %v660 = vld [vmem:[#allocation2 + $0x13a] sm:$0xff]
        %v661 = vld [vmem:[#allocation2 + $0x142] sm:$0xff]
        %v662 = vld [vmem:[#allocation2 + $0x152] sm:$0xff]
        %v663 = vld [vmem:[#allocation2 + $0x15a] sm:$0xff]
        %v664 = vld [vmem:[#allocation2 + $0x16a] sm:$0xff]
        %v665 = vld [vmem:[#allocation2 + $0x172] sm:$0xff]
        %698 = vrot.lane.b32.xlu0 %v634, 8
        %v699 = vpop.permute.xlu0 %698
        %700 = vrot.lane.b32.xlu0 %v635, 8
        %v701 = vpop.permute.xlu0 %700
        %702 = vrot.lane.b32.xlu0 %v636, 8
        %v703 = vpop.permute.xlu0 %702
        %704 = vrot.lane.b32.xlu0 %v637, 8
        %v705 = vpop.permute.xlu0 %704
        %706 = vrot.lane.b32.xlu0 %v638, 8
        %v707 = vpop.permute.xlu0 %706
        %708 = vrot.lane.b32.xlu0 %v639, 8
        %v709 = vpop.permute.xlu0 %708
        %710 = vrot.lane.b32.xlu0 %v640, 8
        %v711 = vpop.permute.xlu0 %710
        %712 = vrot.lane.b32.xlu0 %v641, 8
        %v713 = vpop.permute.xlu0 %712
        %714 = vrot.lane.b32.xlu0 %v642, 8
        %v715 = vpop.permute.xlu0 %714
        %716 = vrot.lane.b32.xlu0 %v643, 8
        %v717 = vpop.permute.xlu0 %716
        %718 = vrot.lane.b32.xlu0 %v644, 8
        %v719 = vpop.permute.xlu0 %718
        %720 = vrot.lane.b32.xlu0 %v645, 8
        %v721 = vpop.permute.xlu0 %720
        %722 = vrot.lane.b32.xlu0 %v646, 8
        %v723 = vpop.permute.xlu0 %722
        %724 = vrot.lane.b32.xlu0 %v647, 8
        %v725 = vpop.permute.xlu0 %724
        %726 = vrot.lane.b32.xlu0 %v648, 8
        %v727 = vpop.permute.xlu0 %726
        %728 = vrot.lane.b32.xlu0 %v649, 8
        %v729 = vpop.permute.xlu0 %728
        %730 = vrot.lane.b32.xlu0 %v650, 8
        %v731 = vpop.permute.xlu0 %730
        %732 = vrot.lane.b32.xlu0 %v651, 8
        %v733 = vpop.permute.xlu0 %732
        %734 = vrot.lane.b32.xlu0 %v652, 8
        %v735 = vpop.permute.xlu0 %734
        %736 = vrot.lane.b32.xlu0 %v653, 8
        %v737 = vpop.permute.xlu0 %736
        %738 = vrot.lane.b32.xlu0 %v654, 8
        %v739 = vpop.permute.xlu0 %738
        %740 = vrot.lane.b32.xlu0 %v655, 8
        %v741 = vpop.permute.xlu0 %740
        %742 = vrot.lane.b32.xlu0 %v656, 8
        %v743 = vpop.permute.xlu0 %742
        %744 = vrot.lane.b32.xlu0 %v657, 8
        %v745 = vpop.permute.xlu0 %744
        %746 = vrot.lane.b32.xlu0 %v658, 8
        %v747 = vpop.permute.xlu0 %746
        %748 = vrot.lane.b32.xlu0 %v659, 8
        %v749 = vpop.permute.xlu0 %748
        %750 = vrot.lane.b32.xlu0 %v660, 8
        %v751 = vpop.permute.xlu0 %750
        %752 = vrot.lane.b32.xlu0 %v661, 8
        %v753 = vpop.permute.xlu0 %752
        %754 = vrot.lane.b32.xlu0 %v662, 8
        %v755 = vpop.permute.xlu0 %754
        %756 = vrot.lane.b32.xlu0 %v663, 8
        %v757 = vpop.permute.xlu0 %756
        %758 = vrot.lane.b32.xlu0 %v664, 8
        %v759 = vpop.permute.xlu0 %758
        %760 = vrot.lane.b32.xlu0 %v665, 8
        %v761 = vpop.permute.xlu0 %760
        %vm794 = vcmask 97344
        %795 = vst.msk [vmem:[#allocation3] sm:$0xff] %vm794, %v699
        %796 = vst.msk [vmem:[#allocation3 + $0x8] sm:$0xff] %vm794, %v701
        %797 = vst.msk [vmem:[#allocation3 + $0x10] sm:$0xff] %vm794, %v703
        %798 = vst.msk [vmem:[#allocation3 + $0x18] sm:$0xff] %vm794, %v705
        %799 = vst.msk [vmem:[#allocation3 + $0x20] sm:$0xff] %vm794, %v707
        %800 = vst.msk [vmem:[#allocation3 + $0x28] sm:$0xff] %vm794, %v709
        %801 = vst.msk [vmem:[#allocation3 + $0x30] sm:$0xff] %vm794, %v711
        %802 = vst.msk [vmem:[#allocation3 + $0x38] sm:$0xff] %vm794, %v713
        %803 = vst.msk [vmem:[#allocation3 + $0x40] sm:$0xff] %vm794, %v715
        %804 = vst.msk [vmem:[#allocation3 + $0x48] sm:$0xff] %vm794, %v717
        %805 = vst.msk [vmem:[#allocation3 + $0x50] sm:$0xff] %vm794, %v719
        %806 = vst.msk [vmem:[#allocation3 + $0x58] sm:$0xff] %vm794, %v721
        %807 = vst.msk [vmem:[#allocation3 + $0x60] sm:$0xff] %vm794, %v723
        %808 = vst.msk [vmem:[#allocation3 + $0x68] sm:$0xff] %vm794, %v725
        %809 = vst.msk [vmem:[#allocation3 + $0x70] sm:$0xff] %vm794, %v727
        %810 = vst.msk [vmem:[#allocation3 + $0x78] sm:$0xff] %vm794, %v729
        %811 = vst.msk [vmem:[#allocation3 + $0x80] sm:$0xff] %vm794, %v731
        %812 = vst.msk [vmem:[#allocation3 + $0x88] sm:$0xff] %vm794, %v733
        %813 = vst.msk [vmem:[#allocation3 + $0x90] sm:$0xff] %vm794, %v735
        %814 = vst.msk [vmem:[#allocation3 + $0x98] sm:$0xff] %vm794, %v737
        %815 = vst.msk [vmem:[#allocation3 + $0xa0] sm:$0xff] %vm794, %v739
        %816 = vst.msk [vmem:[#allocation3 + $0xa8] sm:$0xff] %vm794, %v741
        %817 = vst.msk [vmem:[#allocation3 + $0xb0] sm:$0xff] %vm794, %v743
        %818 = vst.msk [vmem:[#allocation3 + $0xb8] sm:$0xff] %vm794, %v745
        %819 = vst.msk [vmem:[#allocation3 + $0xc0] sm:$0xff] %vm794, %v747
        %820 = vst.msk [vmem:[#allocation3 + $0xc8] sm:$0xff] %vm794, %v749
        %821 = vst.msk [vmem:[#allocation3 + $0xd0] sm:$0xff] %vm794, %v751
        %822 = vst.msk [vmem:[#allocation3 + $0xd8] sm:$0xff] %vm794, %v753
        %823 = vst.msk [vmem:[#allocation3 + $0xe0] sm:$0xff] %vm794, %v755
        %824 = vst.msk [vmem:[#allocation3 + $0xe8] sm:$0xff] %vm794, %v757
        %825 = vst.msk [vmem:[#allocation3 + $0xf0] sm:$0xff] %vm794, %v759
        %826 = vst.msk [vmem:[#allocation3 + $0xf8] sm:$0xff] %vm794, %v761
        %v827 = vld [vmem:[%s344] sm:$0xff]
        %v828 = vld [vmem:[%s344 + $0x8] sm:$0xff]
        %v829 = vld [vmem:[%s344 + $0x18] sm:$0xff]
        %v830 = vld [vmem:[%s344 + $0x20] sm:$0xff]
        %v831 = vld [vmem:[%s344 + $0x30] sm:$0xff]
        %v832 = vld [vmem:[%s344 + $0x38] sm:$0xff]
        %v833 = vld [vmem:[%s344 + $0x48] sm:$0xff]
        %v834 = vld [vmem:[%s344 + $0x50] sm:$0xff]
        %v835 = vld [vmem:[%s344 + $0x60] sm:$0xff]
        %v836 = vld [vmem:[%s344 + $0x68] sm:$0xff]
        %v837 = vld [vmem:[%s344 + $0x78] sm:$0xff]
        %v838 = vld [vmem:[%s344 + $0x80] sm:$0xff]
        %v839 = vld [vmem:[%s344 + $0x90] sm:$0xff]
        %v840 = vld [vmem:[%s344 + $0x98] sm:$0xff]
        %v841 = vld [vmem:[%s344 + $0xa8] sm:$0xff]
        %v842 = vld [vmem:[%s344 + $0xb0] sm:$0xff]
        %v843 = vld [vmem:[%s344 + $0xc0] sm:$0xff]
        %v844 = vld [vmem:[%s344 + $0xc8] sm:$0xff]
        %v845 = vld [vmem:[%s344 + $0xd8] sm:$0xff]
        %v846 = vld [vmem:[%s344 + $0xe0] sm:$0xff]
        %v847 = vld [vmem:[%s344 + $0xf0] sm:$0xff]
        %v848 = vld [vmem:[%s344 + $0xf8] sm:$0xff]
        %v849 = vld [vmem:[%s344 + $0x108] sm:$0xff]
        %v850 = vld [vmem:[%s344 + $0x110] sm:$0xff]
        %v851 = vld [vmem:[%s344 + $0x120] sm:$0xff]
        %v852 = vld [vmem:[%s344 + $0x128] sm:$0xff]
        %v853 = vld [vmem:[%s344 + $0x138] sm:$0xff]
        %v854 = vld [vmem:[%s344 + $0x140] sm:$0xff]
        %v855 = vld [vmem:[%s344 + $0x150] sm:$0xff]
        %v856 = vld [vmem:[%s344 + $0x158] sm:$0xff]
        %v857 = vld [vmem:[%s344 + $0x168] sm:$0xff]
        %v858 = vld [vmem:[%s344 + $0x170] sm:$0xff]
        %891 = vrot.lane.b32.xlu0 %v827, 12
        %v892 = vpop.permute.xlu0 %891
        %893 = vrot.lane.b32.xlu0 %v828, 12
        %v894 = vpop.permute.xlu0 %893
        %895 = vrot.lane.b32.xlu0 %v829, 12
        %v896 = vpop.permute.xlu0 %895
        %897 = vrot.lane.b32.xlu0 %v830, 12
        %v898 = vpop.permute.xlu0 %897
        %899 = vrot.lane.b32.xlu0 %v831, 12
        %v900 = vpop.permute.xlu0 %899
        %901 = vrot.lane.b32.xlu0 %v832, 12
        %v902 = vpop.permute.xlu0 %901
        %903 = vrot.lane.b32.xlu0 %v833, 12
        %v904 = vpop.permute.xlu0 %903
        %905 = vrot.lane.b32.xlu0 %v834, 12
        %v906 = vpop.permute.xlu0 %905
        %907 = vrot.lane.b32.xlu0 %v835, 12
        %v908 = vpop.permute.xlu0 %907
        %909 = vrot.lane.b32.xlu0 %v836, 12
        %v910 = vpop.permute.xlu0 %909
        %911 = vrot.lane.b32.xlu0 %v837, 12
        %v912 = vpop.permute.xlu0 %911
        %913 = vrot.lane.b32.xlu0 %v838, 12
        %v914 = vpop.permute.xlu0 %913
        %915 = vrot.lane.b32.xlu0 %v839, 12
        %v916 = vpop.permute.xlu0 %915
        %917 = vrot.lane.b32.xlu0 %v840, 12
        %v918 = vpop.permute.xlu0 %917
        %919 = vrot.lane.b32.xlu0 %v841, 12
        %v920 = vpop.permute.xlu0 %919
        %921 = vrot.lane.b32.xlu0 %v842, 12
        %v922 = vpop.permute.xlu0 %921
        %923 = vrot.lane.b32.xlu0 %v843, 12
        %v924 = vpop.permute.xlu0 %923
        %925 = vrot.lane.b32.xlu0 %v844, 12
        %v926 = vpop.permute.xlu0 %925
        %927 = vrot.lane.b32.xlu0 %v845, 12
        %v928 = vpop.permute.xlu0 %927
        %929 = vrot.lane.b32.xlu0 %v846, 12
        %v930 = vpop.permute.xlu0 %929
        %931 = vrot.lane.b32.xlu0 %v847, 12
        %v932 = vpop.permute.xlu0 %931
        %933 = vrot.lane.b32.xlu0 %v848, 12
        %v934 = vpop.permute.xlu0 %933
        %935 = vrot.lane.b32.xlu0 %v849, 12
        %v936 = vpop.permute.xlu0 %935
        %937 = vrot.lane.b32.xlu0 %v850, 12
        %v938 = vpop.permute.xlu0 %937
        %939 = vrot.lane.b32.xlu0 %v851, 12
        %v940 = vpop.permute.xlu0 %939
        %941 = vrot.lane.b32.xlu0 %v852, 12
        %v942 = vpop.permute.xlu0 %941
        %943 = vrot.lane.b32.xlu0 %v853, 12
        %v944 = vpop.permute.xlu0 %943
        %945 = vrot.lane.b32.xlu0 %v854, 12
        %v946 = vpop.permute.xlu0 %945
        %947 = vrot.lane.b32.xlu0 %v855, 12
        %v948 = vpop.permute.xlu0 %947
        %949 = vrot.lane.b32.xlu0 %v856, 12
        %v950 = vpop.permute.xlu0 %949
        %951 = vrot.lane.b32.xlu0 %v857, 12
        %v952 = vpop.permute.xlu0 %951
        %953 = vrot.lane.b32.xlu0 %v858, 12
        %v954 = vpop.permute.xlu0 %953
        %vm987 = vcmask 130144
        %988 = vst.msk [vmem:[#allocation3] sm:$0xff] %vm987, %v892
        %989 = vst.msk [vmem:[#allocation3 + $0x8] sm:$0xff] %vm987, %v894
        %990 = vst.msk [vmem:[#allocation3 + $0x10] sm:$0xff] %vm987, %v896
        %991 = vst.msk [vmem:[#allocation3 + $0x18] sm:$0xff] %vm987, %v898
        %992 = vst.msk [vmem:[#allocation3 + $0x20] sm:$0xff] %vm987, %v900
        %993 = vst.msk [vmem:[#allocation3 + $0x28] sm:$0xff] %vm987, %v902
        %994 = vst.msk [vmem:[#allocation3 + $0x30] sm:$0xff] %vm987, %v904
        %995 = vst.msk [vmem:[#allocation3 + $0x38] sm:$0xff] %vm987, %v906
        %996 = vst.msk [vmem:[#allocation3 + $0x40] sm:$0xff] %vm987, %v908
        %997 = vst.msk [vmem:[#allocation3 + $0x48] sm:$0xff] %vm987, %v910
        %998 = vst.msk [vmem:[#allocation3 + $0x50] sm:$0xff] %vm987, %v912
        %999 = vst.msk [vmem:[#allocation3 + $0x58] sm:$0xff] %vm987, %v914
        %1000 = vst.msk [vmem:[#allocation3 + $0x60] sm:$0xff] %vm987, %v916
        %1001 = vst.msk [vmem:[#allocation3 + $0x68] sm:$0xff] %vm987, %v918
        %1002 = vst.msk [vmem:[#allocation3 + $0x70] sm:$0xff] %vm987, %v920
        %1003 = vst.msk [vmem:[#allocation3 + $0x78] sm:$0xff] %vm987, %v922
        %1004 = vst.msk [vmem:[#allocation3 + $0x80] sm:$0xff] %vm987, %v924
        %1005 = vst.msk [vmem:[#allocation3 + $0x88] sm:$0xff] %vm987, %v926
        %1006 = vst.msk [vmem:[#allocation3 + $0x90] sm:$0xff] %vm987, %v928
        %1007 = vst.msk [vmem:[#allocation3 + $0x98] sm:$0xff] %vm987, %v930
        %1008 = vst.msk [vmem:[#allocation3 + $0xa0] sm:$0xff] %vm987, %v932
        %1009 = vst.msk [vmem:[#allocation3 + $0xa8] sm:$0xff] %vm987, %v934
        %1010 = vst.msk [vmem:[#allocation3 + $0xb0] sm:$0xff] %vm987, %v936
        %1011 = vst.msk [vmem:[#allocation3 + $0xb8] sm:$0xff] %vm987, %v938
        %1012 = vst.msk [vmem:[#allocation3 + $0xc0] sm:$0xff] %vm987, %v940
        %1013 = vst.msk [vmem:[#allocation3 + $0xc8] sm:$0xff] %vm987, %v942
        %1014 = vst.msk [vmem:[#allocation3 + $0xd0] sm:$0xff] %vm987, %v944
        %1015 = vst.msk [vmem:[#allocation3 + $0xd8] sm:$0xff] %vm987, %v946
        %1016 = vst.msk [vmem:[#allocation3 + $0xe0] sm:$0xff] %vm987, %v948
        %1017 = vst.msk [vmem:[#allocation3 + $0xe8] sm:$0xff] %vm987, %v950
        %1018 = vst.msk [vmem:[#allocation3 + $0xf0] sm:$0xff] %vm987, %v952
        %1019 = vst.msk [vmem:[#allocation3 + $0xf8] sm:$0xff] %vm987, %v954
        %v1020 = vld [vmem:[%s344 + $0x1] sm:$0xff]
        %v1021 = vld [vmem:[%s344 + $0x9] sm:$0xff]
        %v1022 = vld [vmem:[%s344 + $0x19] sm:$0xff]
        %v1023 = vld [vmem:[%s344 + $0x21] sm:$0xff]
        %v1024 = vld [vmem:[%s344 + $0x31] sm:$0xff]
        %v1025 = vld [vmem:[%s344 + $0x39] sm:$0xff]
        %v1026 = vld [vmem:[%s344 + $0x49] sm:$0xff]
        %v1027 = vld [vmem:[%s344 + $0x51] sm:$0xff]
        %v1028 = vld [vmem:[%s344 + $0x61] sm:$0xff]
        %v1029 = vld [vmem:[%s344 + $0x69] sm:$0xff]
        %v1030 = vld [vmem:[%s344 + $0x79] sm:$0xff]
        %v1031 = vld [vmem:[%s344 + $0x81] sm:$0xff]
        %v1032 = vld [vmem:[%s344 + $0x91] sm:$0xff]
        %v1033 = vld [vmem:[%s344 + $0x99] sm:$0xff]
        %v1034 = vld [vmem:[%s344 + $0xa9] sm:$0xff]
        %v1035 = vld [vmem:[%s344 + $0xb1] sm:$0xff]
        %v1036 = vld [vmem:[%s344 + $0xc1] sm:$0xff]
        %v1037 = vld [vmem:[%s344 + $0xc9] sm:$0xff]
        %v1038 = vld [vmem:[%s344 + $0xd9] sm:$0xff]
        %v1039 = vld [vmem:[%s344 + $0xe1] sm:$0xff]
        %v1040 = vld [vmem:[%s344 + $0xf1] sm:$0xff]
        %v1041 = vld [vmem:[%s344 + $0xf9] sm:$0xff]
        %v1042 = vld [vmem:[%s344 + $0x109] sm:$0xff]
        %v1043 = vld [vmem:[%s344 + $0x111] sm:$0xff]
        %v1044 = vld [vmem:[%s344 + $0x121] sm:$0xff]
        %v1045 = vld [vmem:[%s344 + $0x129] sm:$0xff]
        %v1046 = vld [vmem:[%s344 + $0x139] sm:$0xff]
        %v1047 = vld [vmem:[%s344 + $0x141] sm:$0xff]
        %v1048 = vld [vmem:[%s344 + $0x151] sm:$0xff]
        %v1049 = vld [vmem:[%s344 + $0x159] sm:$0xff]
        %v1050 = vld [vmem:[%s344 + $0x169] sm:$0xff]
        %v1051 = vld [vmem:[%s344 + $0x171] sm:$0xff]
        %1084 = vrot.lane.b32.xlu0 %v1020, 16
        %v1085 = vpop.permute.xlu0 %1084
        %1086 = vrot.lane.b32.xlu0 %v1021, 16
        %v1087 = vpop.permute.xlu0 %1086
        %1088 = vrot.lane.b32.xlu0 %v1022, 16
        %v1089 = vpop.permute.xlu0 %1088
        %1090 = vrot.lane.b32.xlu0 %v1023, 16
        %v1091 = vpop.permute.xlu0 %1090
        %1092 = vrot.lane.b32.xlu0 %v1024, 16
        %v1093 = vpop.permute.xlu0 %1092
        %1094 = vrot.lane.b32.xlu0 %v1025, 16
        %v1095 = vpop.permute.xlu0 %1094
        %1096 = vrot.lane.b32.xlu0 %v1026, 16
        %v1097 = vpop.permute.xlu0 %1096
        %1098 = vrot.lane.b32.xlu0 %v1027, 16
        %v1099 = vpop.permute.xlu0 %1098
        %1100 = vrot.lane.b32.xlu0 %v1028, 16
        %v1101 = vpop.permute.xlu0 %1100
        %1102 = vrot.lane.b32.xlu0 %v1029, 16
        %v1103 = vpop.permute.xlu0 %1102
        %1104 = vrot.lane.b32.xlu0 %v1030, 16
        %v1105 = vpop.permute.xlu0 %1104
        %1106 = vrot.lane.b32.xlu0 %v1031, 16
        %v1107 = vpop.permute.xlu0 %1106
        %1108 = vrot.lane.b32.xlu0 %v1032, 16
        %v1109 = vpop.permute.xlu0 %1108
        %1110 = vrot.lane.b32.xlu0 %v1033, 16
        %v1111 = vpop.permute.xlu0 %1110
        %1112 = vrot.lane.b32.xlu0 %v1034, 16
        %v1113 = vpop.permute.xlu0 %1112
        %1114 = vrot.lane.b32.xlu0 %v1035, 16
        %v1115 = vpop.permute.xlu0 %1114
        %1116 = vrot.lane.b32.xlu0 %v1036, 16
        %v1117 = vpop.permute.xlu0 %1116
        %1118 = vrot.lane.b32.xlu0 %v1037, 16
        %v1119 = vpop.permute.xlu0 %1118
        %1120 = vrot.lane.b32.xlu0 %v1038, 16
        %v1121 = vpop.permute.xlu0 %1120
        %1122 = vrot.lane.b32.xlu0 %v1039, 16
        %v1123 = vpop.permute.xlu0 %1122
        %1124 = vrot.lane.b32.xlu0 %v1040, 16
        %v1125 = vpop.permute.xlu0 %1124
        %1126 = vrot.lane.b32.xlu0 %v1041, 16
        %v1127 = vpop.permute.xlu0 %1126
        %1128 = vrot.lane.b32.xlu0 %v1042, 16
        %v1129 = vpop.permute.xlu0 %1128
        %1130 = vrot.lane.b32.xlu0 %v1043, 16
        %v1131 = vpop.permute.xlu0 %1130
        %1132 = vrot.lane.b32.xlu0 %v1044, 16
        %v1133 = vpop.permute.xlu0 %1132
        %1134 = vrot.lane.b32.xlu0 %v1045, 16
        %v1135 = vpop.permute.xlu0 %1134
        %1136 = vrot.lane.b32.xlu0 %v1046, 16
        %v1137 = vpop.permute.xlu0 %1136
        %1138 = vrot.lane.b32.xlu0 %v1047, 16
        %v1139 = vpop.permute.xlu0 %1138
        %1140 = vrot.lane.b32.xlu0 %v1048, 16
        %v1141 = vpop.permute.xlu0 %1140
        %1142 = vrot.lane.b32.xlu0 %v1049, 16
        %v1143 = vpop.permute.xlu0 %1142
        %1144 = vrot.lane.b32.xlu0 %v1050, 16
        %v1145 = vpop.permute.xlu0 %1144
        %1146 = vrot.lane.b32.xlu0 %v1051, 16
        %v1147 = vpop.permute.xlu0 %1146
        %vm1180 = vcmask 162944
        %1181 = vst.msk [vmem:[#allocation3] sm:$0xff] %vm1180, %v1085
        %1182 = vst.msk [vmem:[#allocation3 + $0x8] sm:$0xff] %vm1180, %v1087
        %1183 = vst.msk [vmem:[#allocation3 + $0x10] sm:$0xff] %vm1180, %v1089
        %1184 = vst.msk [vmem:[#allocation3 + $0x18] sm:$0xff] %vm1180, %v1091
        %1185 = vst.msk [vmem:[#allocation3 + $0x20] sm:$0xff] %vm1180, %v1093
        %1186 = vst.msk [vmem:[#allocation3 + $0x28] sm:$0xff] %vm1180, %v1095
        %1187 = vst.msk [vmem:[#allocation3 + $0x30] sm:$0xff] %vm1180, %v1097
        %1188 = vst.msk [vmem:[#allocation3 + $0x38] sm:$0xff] %vm1180, %v1099
        %1189 = vst.msk [vmem:[#allocation3 + $0x40] sm:$0xff] %vm1180, %v1101
        %1190 = vst.msk [vmem:[#allocation3 + $0x48] sm:$0xff] %vm1180, %v1103
        %1191 = vst.msk [vmem:[#allocation3 + $0x50] sm:$0xff] %vm1180, %v1105
        %1192 = vst.msk [vmem:[#allocation3 + $0x58] sm:$0xff] %vm1180, %v1107
        %1193 = vst.msk [vmem:[#allocation3 + $0x60] sm:$0xff] %vm1180, %v1109
        %1194 = vst.msk [vmem:[#allocation3 + $0x68] sm:$0xff] %vm1180, %v1111
        %1195 = vst.msk [vmem:[#allocation3 + $0x70] sm:$0xff] %vm1180, %v1113
        %1196 = vst.msk [vmem:[#allocation3 + $0x78] sm:$0xff] %vm1180, %v1115
        %1197 = vst.msk [vmem:[#allocation3 + $0x80] sm:$0xff] %vm1180, %v1117
        %1198 = vst.msk [vmem:[#allocation3 + $0x88] sm:$0xff] %vm1180, %v1119
        %1199 = vst.msk [vmem:[#allocation3 + $0x90] sm:$0xff] %vm1180, %v1121
        %1200 = vst.msk [vmem:[#allocation3 + $0x98] sm:$0xff] %vm1180, %v1123
        %1201 = vst.msk [vmem:[#allocation3 + $0xa0] sm:$0xff] %vm1180, %v1125
        %1202 = vst.msk [vmem:[#allocation3 + $0xa8] sm:$0xff] %vm1180, %v1127
        %1203 = vst.msk [vmem:[#allocation3 + $0xb0] sm:$0xff] %vm1180, %v1129
        %1204 = vst.msk [vmem:[#allocation3 + $0xb8] sm:$0xff] %vm1180, %v1131
        %1205 = vst.msk [vmem:[#allocation3 + $0xc0] sm:$0xff] %vm1180, %v1133
        %1206 = vst.msk [vmem:[#allocation3 + $0xc8] sm:$0xff] %vm1180, %v1135
        %1207 = vst.msk [vmem:[#allocation3 + $0xd0] sm:$0xff] %vm1180, %v1137
        %1208 = vst.msk [vmem:[#allocation3 + $0xd8] sm:$0xff] %vm1180, %v1139
        %1209 = vst.msk [vmem:[#allocation3 + $0xe0] sm:$0xff] %vm1180, %v1141
        %1210 = vst.msk [vmem:[#allocation3 + $0xe8] sm:$0xff] %vm1180, %v1143
        %1211 = vst.msk [vmem:[#allocation3 + $0xf0] sm:$0xff] %vm1180, %v1145
        %1212 = vst.msk [vmem:[#allocation3 + $0xf8] sm:$0xff] %vm1180, %v1147
        %v1213 = vld [vmem:[%s344 + $0x2] sm:$0xff]
        %v1214 = vld [vmem:[%s344 + $0xa] sm:$0xff]
        %v1215 = vld [vmem:[%s344 + $0x1a] sm:$0xff]
        %v1216 = vld [vmem:[%s344 + $0x22] sm:$0xff]
        %v1217 = vld [vmem:[%s344 + $0x32] sm:$0xff]
        %v1218 = vld [vmem:[%s344 + $0x3a] sm:$0xff]
        %v1219 = vld [vmem:[%s344 + $0x4a] sm:$0xff]
        %v1220 = vld [vmem:[%s344 + $0x52] sm:$0xff]
        %v1221 = vld [vmem:[%s344 + $0x62] sm:$0xff]
        %v1222 = vld [vmem:[%s344 + $0x6a] sm:$0xff]
        %v1223 = vld [vmem:[%s344 + $0x7a] sm:$0xff]
        %v1224 = vld [vmem:[%s344 + $0x82] sm:$0xff]
        %v1225 = vld [vmem:[%s344 + $0x92] sm:$0xff]
        %v1226 = vld [vmem:[%s344 + $0x9a] sm:$0xff]
        %v1227 = vld [vmem:[%s344 + $0xaa] sm:$0xff]
        %v1228 = vld [vmem:[%s344 + $0xb2] sm:$0xff]
        %v1229 = vld [vmem:[%s344 + $0xc2] sm:$0xff]
        %v1230 = vld [vmem:[%s344 + $0xca] sm:$0xff]
        %v1231 = vld [vmem:[%s344 + $0xda] sm:$0xff]
        %v1232 = vld [vmem:[%s344 + $0xe2] sm:$0xff]
        %v1233 = vld [vmem:[%s344 + $0xf2] sm:$0xff]
        %v1234 = vld [vmem:[%s344 + $0xfa] sm:$0xff]
        %v1235 = vld [vmem:[%s344 + $0x10a] sm:$0xff]
        %v1236 = vld [vmem:[%s344 + $0x112] sm:$0xff]
        %v1237 = vld [vmem:[%s344 + $0x122] sm:$0xff]
        %v1238 = vld [vmem:[%s344 + $0x12a] sm:$0xff]
        %v1239 = vld [vmem:[%s344 + $0x13a] sm:$0xff]
        %v1240 = vld [vmem:[%s344 + $0x142] sm:$0xff]
        %v1241 = vld [vmem:[%s344 + $0x152] sm:$0xff]
        %v1242 = vld [vmem:[%s344 + $0x15a] sm:$0xff]
        %v1243 = vld [vmem:[%s344 + $0x16a] sm:$0xff]
        %v1244 = vld [vmem:[%s344 + $0x172] sm:$0xff]
        %1277 = vrot.lane.b32.xlu0 %v1213, 20
        %v1278 = vpop.permute.xlu0 %1277
        %1279 = vrot.lane.b32.xlu0 %v1214, 20
        %v1280 = vpop.permute.xlu0 %1279
        %1281 = vrot.lane.b32.xlu0 %v1215, 20
        %v1282 = vpop.permute.xlu0 %1281
        %1283 = vrot.lane.b32.xlu0 %v1216, 20
        %v1284 = vpop.permute.xlu0 %1283
        %1285 = vrot.lane.b32.xlu0 %v1217, 20
        %v1286 = vpop.permute.xlu0 %1285
        %1287 = vrot.lane.b32.xlu0 %v1218, 20
        %v1288 = vpop.permute.xlu0 %1287
        %1289 = vrot.lane.b32.xlu0 %v1219, 20
        %v1290 = vpop.permute.xlu0 %1289
        %1291 = vrot.lane.b32.xlu0 %v1220, 20
        %v1292 = vpop.permute.xlu0 %1291
        %1293 = vrot.lane.b32.xlu0 %v1221, 20
        %v1294 = vpop.permute.xlu0 %1293
        %1295 = vrot.lane.b32.xlu0 %v1222, 20
        %v1296 = vpop.permute.xlu0 %1295
        %1297 = vrot.lane.b32.xlu0 %v1223, 20
        %v1298 = vpop.permute.xlu0 %1297
        %1299 = vrot.lane.b32.xlu0 %v1224, 20
        %v1300 = vpop.permute.xlu0 %1299
        %1301 = vrot.lane.b32.xlu0 %v1225, 20
        %v1302 = vpop.permute.xlu0 %1301
        %1303 = vrot.lane.b32.xlu0 %v1226, 20
        %v1304 = vpop.permute.xlu0 %1303
        %1305 = vrot.lane.b32.xlu0 %v1227, 20
        %v1306 = vpop.permute.xlu0 %1305
        %1307 = vrot.lane.b32.xlu0 %v1228, 20
        %v1308 = vpop.permute.xlu0 %1307
        %1309 = vrot.lane.b32.xlu0 %v1229, 20
        %v1310 = vpop.permute.xlu0 %1309
        %1311 = vrot.lane.b32.xlu0 %v1230, 20
        %v1312 = vpop.permute.xlu0 %1311
        %1313 = vrot.lane.b32.xlu0 %v1231, 20
        %v1314 = vpop.permute.xlu0 %1313
        %1315 = vrot.lane.b32.xlu0 %v1232, 20
        %v1316 = vpop.permute.xlu0 %1315
        %1317 = vrot.lane.b32.xlu0 %v1233, 20
        %v1318 = vpop.permute.xlu0 %1317
        %1319 = vrot.lane.b32.xlu0 %v1234, 20
        %v1320 = vpop.permute.xlu0 %1319
        %1321 = vrot.lane.b32.xlu0 %v1235, 20
        %v1322 = vpop.permute.xlu0 %1321
        %1323 = vrot.lane.b32.xlu0 %v1236, 20
        %v1324 = vpop.permute.xlu0 %1323
        %1325 = vrot.lane.b32.xlu0 %v1237, 20
        %v1326 = vpop.permute.xlu0 %1325
        %1327 = vrot.lane.b32.xlu0 %v1238, 20
        %v1328 = vpop.permute.xlu0 %1327
        %1329 = vrot.lane.b32.xlu0 %v1239, 20
        %v1330 = vpop.permute.xlu0 %1329
        %1331 = vrot.lane.b32.xlu0 %v1240, 20
        %v1332 = vpop.permute.xlu0 %1331
        %1333 = vrot.lane.b32.xlu0 %v1241, 20
        %v1334 = vpop.permute.xlu0 %1333
        %1335 = vrot.lane.b32.xlu0 %v1242, 20
        %v1336 = vpop.permute.xlu0 %1335
        %1337 = vrot.lane.b32.xlu0 %v1243, 20
        %v1338 = vpop.permute.xlu0 %1337
        %1339 = vrot.lane.b32.xlu0 %v1244, 20
        %v1340 = vpop.permute.xlu0 %1339
        %vm1373 = vcmask 195744
        %1374 = vst.msk [vmem:[#allocation3] sm:$0xff] %vm1373, %v1278
        %1375 = vst.msk [vmem:[#allocation3 + $0x8] sm:$0xff] %vm1373, %v1280
        %1376 = vst.msk [vmem:[#allocation3 + $0x10] sm:$0xff] %vm1373, %v1282
        %1377 = vst.msk [vmem:[#allocation3 + $0x18] sm:$0xff] %vm1373, %v1284
        %1378 = vst.msk [vmem:[#allocation3 + $0x20] sm:$0xff] %vm1373, %v1286
        %1379 = vst.msk [vmem:[#allocation3 + $0x28] sm:$0xff] %vm1373, %v1288
        %1380 = vst.msk [vmem:[#allocation3 + $0x30] sm:$0xff] %vm1373, %v1290
        %1381 = vst.msk [vmem:[#allocation3 + $0x38] sm:$0xff] %vm1373, %v1292
        %1382 = vst.msk [vmem:[#allocation3 + $0x40] sm:$0xff] %vm1373, %v1294
        %1383 = vst.msk [vmem:[#allocation3 + $0x48] sm:$0xff] %vm1373, %v1296
        %1384 = vst.msk [vmem:[#allocation3 + $0x50] sm:$0xff] %vm1373, %v1298
        %1385 = vst.msk [vmem:[#allocation3 + $0x58] sm:$0xff] %vm1373, %v1300
        %1386 = vst.msk [vmem:[#allocation3 + $0x60] sm:$0xff] %vm1373, %v1302
        %1387 = vst.msk [vmem:[#allocation3 + $0x68] sm:$0xff] %vm1373, %v1304
        %1388 = vst.msk [vmem:[#allocation3 + $0x70] sm:$0xff] %vm1373, %v1306
        %1389 = vst.msk [vmem:[#allocation3 + $0x78] sm:$0xff] %vm1373, %v1308
        %1390 = vst.msk [vmem:[#allocation3 + $0x80] sm:$0xff] %vm1373, %v1310
        %1391 = vst.msk [vmem:[#allocation3 + $0x88] sm:$0xff] %vm1373, %v1312
        %1392 = vst.msk [vmem:[#allocation3 + $0x90] sm:$0xff] %vm1373, %v1314
        %1393 = vst.msk [vmem:[#allocation3 + $0x98] sm:$0xff] %vm1373, %v1316
        %1394 = vst.msk [vmem:[#allocation3 + $0xa0] sm:$0xff] %vm1373, %v1318
        %1395 = vst.msk [vmem:[#allocation3 + $0xa8] sm:$0xff] %vm1373, %v1320
        %1396 = vst.msk [vmem:[#allocation3 + $0xb0] sm:$0xff] %vm1373, %v1322
        %1397 = vst.msk [vmem:[#allocation3 + $0xb8] sm:$0xff] %vm1373, %v1324
        %1398 = vst.msk [vmem:[#allocation3 + $0xc0] sm:$0xff] %vm1373, %v1326
        %1399 = vst.msk [vmem:[#allocation3 + $0xc8] sm:$0xff] %vm1373, %v1328
        %1400 = vst.msk [vmem:[#allocation3 + $0xd0] sm:$0xff] %vm1373, %v1330
        %1401 = vst.msk [vmem:[#allocation3 + $0xd8] sm:$0xff] %vm1373, %v1332
        %1402 = vst.msk [vmem:[#allocation3 + $0xe0] sm:$0xff] %vm1373, %v1334
        %1403 = vst.msk [vmem:[#allocation3 + $0xe8] sm:$0xff] %vm1373, %v1336
        %1404 = vst.msk [vmem:[#allocation3 + $0xf0] sm:$0xff] %vm1373, %v1338
        %1405 = vst.msk [vmem:[#allocation3 + $0xf8] sm:$0xff] %vm1373, %v1340
        %s1406 = scalar_lea.vmem [#allocation2], 48
        %v1407 = vld [vmem:[%s1406] sm:$0xff]
        %v1408 = vld [vmem:[%s1406 + $0x8] sm:$0xff]
        %v1409 = vld [vmem:[%s1406 + $0x18] sm:$0xff]
        %v1410 = vld [vmem:[%s1406 + $0x20] sm:$0xff]
        %v1411 = vld [vmem:[%s1406 + $0x30] sm:$0xff]
        %v1412 = vld [vmem:[%s1406 + $0x38] sm:$0xff]
        %v1413 = vld [vmem:[%s1406 + $0x48] sm:$0xff]
        %v1414 = vld [vmem:[%s1406 + $0x50] sm:$0xff]
        %v1415 = vld [vmem:[%s1406 + $0x60] sm:$0xff]
        %v1416 = vld [vmem:[%s1406 + $0x68] sm:$0xff]
        %v1417 = vld [vmem:[%s1406 + $0x78] sm:$0xff]
        %v1418 = vld [vmem:[%s1406 + $0x80] sm:$0xff]
        %v1419 = vld [vmem:[%s1406 + $0x90] sm:$0xff]
        %v1420 = vld [vmem:[%s1406 + $0x98] sm:$0xff]
        %v1421 = vld [vmem:[%s1406 + $0xa8] sm:$0xff]
        %v1422 = vld [vmem:[%s1406 + $0xb0] sm:$0xff]
        %v1423 = vld [vmem:[%s1406 + $0xc0] sm:$0xff]
        %v1424 = vld [vmem:[%s1406 + $0xc8] sm:$0xff]
        %v1425 = vld [vmem:[%s1406 + $0xd8] sm:$0xff]
        %v1426 = vld [vmem:[%s1406 + $0xe0] sm:$0xff]
        %v1427 = vld [vmem:[%s1406 + $0xf0] sm:$0xff]
        %v1428 = vld [vmem:[%s1406 + $0xf8] sm:$0xff]
        %v1429 = vld [vmem:[%s1406 + $0x108] sm:$0xff]
        %v1430 = vld [vmem:[%s1406 + $0x110] sm:$0xff]
        %v1431 = vld [vmem:[%s1406 + $0x120] sm:$0xff]
        %v1432 = vld [vmem:[%s1406 + $0x128] sm:$0xff]
        %v1433 = vld [vmem:[%s1406 + $0x138] sm:$0xff]
        %v1434 = vld [vmem:[%s1406 + $0x140] sm:$0xff]
        %v1435 = vld [vmem:[%s1406 + $0x150] sm:$0xff]
        %v1436 = vld [vmem:[%s1406 + $0x158] sm:$0xff]
        %v1437 = vld [vmem:[%s1406 + $0x168] sm:$0xff]
        %v1438 = vld [vmem:[%s1406 + $0x170] sm:$0xff]
        %1471 = vrot.lane.b32.xlu0 %v1407, 24
        %v1472 = vpop.permute.xlu0 %1471
        %1473 = vrot.lane.b32.xlu0 %v1408, 24
        %v1474 = vpop.permute.xlu0 %1473
        %1475 = vrot.lane.b32.xlu0 %v1409, 24
        %v1476 = vpop.permute.xlu0 %1475
        %1477 = vrot.lane.b32.xlu0 %v1410, 24
        %v1478 = vpop.permute.xlu0 %1477
        %1479 = vrot.lane.b32.xlu0 %v1411, 24
        %v1480 = vpop.permute.xlu0 %1479
        %1481 = vrot.lane.b32.xlu0 %v1412, 24
        %v1482 = vpop.permute.xlu0 %1481
        %1483 = vrot.lane.b32.xlu0 %v1413, 24
        %v1484 = vpop.permute.xlu0 %1483
        %1485 = vrot.lane.b32.xlu0 %v1414, 24
        %v1486 = vpop.permute.xlu0 %1485
        %1487 = vrot.lane.b32.xlu0 %v1415, 24
        %v1488 = vpop.permute.xlu0 %1487
        %1489 = vrot.lane.b32.xlu0 %v1416, 24
        %v1490 = vpop.permute.xlu0 %1489
        %1491 = vrot.lane.b32.xlu0 %v1417, 24
        %v1492 = vpop.permute.xlu0 %1491
        %1493 = vrot.lane.b32.xlu0 %v1418, 24
        %v1494 = vpop.permute.xlu0 %1493
        %1495 = vrot.lane.b32.xlu0 %v1419, 24
        %v1496 = vpop.permute.xlu0 %1495
        %1497 = vrot.lane.b32.xlu0 %v1420, 24
        %v1498 = vpop.permute.xlu0 %1497
        %1499 = vrot.lane.b32.xlu0 %v1421, 24
        %v1500 = vpop.permute.xlu0 %1499
        %1501 = vrot.lane.b32.xlu0 %v1422, 24
        %v1502 = vpop.permute.xlu0 %1501
        %1503 = vrot.lane.b32.xlu0 %v1423, 24
        %v1504 = vpop.permute.xlu0 %1503
        %1505 = vrot.lane.b32.xlu0 %v1424, 24
        %v1506 = vpop.permute.xlu0 %1505
        %1507 = vrot.lane.b32.xlu0 %v1425, 24
        %v1508 = vpop.permute.xlu0 %1507
        %1509 = vrot.lane.b32.xlu0 %v1426, 24
        %v1510 = vpop.permute.xlu0 %1509
        %1511 = vrot.lane.b32.xlu0 %v1427, 24
        %v1512 = vpop.permute.xlu0 %1511
        %1513 = vrot.lane.b32.xlu0 %v1428, 24
        %v1514 = vpop.permute.xlu0 %1513
        %1515 = vrot.lane.b32.xlu0 %v1429, 24
        %v1516 = vpop.permute.xlu0 %1515
        %1517 = vrot.lane.b32.xlu0 %v1430, 24
        %v1518 = vpop.permute.xlu0 %1517
        %1519 = vrot.lane.b32.xlu0 %v1431, 24
        %v1520 = vpop.permute.xlu0 %1519
        %1521 = vrot.lane.b32.xlu0 %v1432, 24
        %v1522 = vpop.permute.xlu0 %1521
        %1523 = vrot.lane.b32.xlu0 %v1433, 24
        %v1524 = vpop.permute.xlu0 %1523
        %1525 = vrot.lane.b32.xlu0 %v1434, 24
        %v1526 = vpop.permute.xlu0 %1525
        %1527 = vrot.lane.b32.xlu0 %v1435, 24
        %v1528 = vpop.permute.xlu0 %1527
        %1529 = vrot.lane.b32.xlu0 %v1436, 24
        %v1530 = vpop.permute.xlu0 %1529
        %1531 = vrot.lane.b32.xlu0 %v1437, 24
        %v1532 = vpop.permute.xlu0 %1531
        %1533 = vrot.lane.b32.xlu0 %v1438, 24
        %v1534 = vpop.permute.xlu0 %1533
        %vm1567 = vcmask 228544
        %1568 = vst.msk [vmem:[#allocation3] sm:$0xff] %vm1567, %v1472
        %1569 = vst.msk [vmem:[#allocation3 + $0x8] sm:$0xff] %vm1567, %v1474
        %1570 = vst.msk [vmem:[#allocation3 + $0x10] sm:$0xff] %vm1567, %v1476
        %1571 = vst.msk [vmem:[#allocation3 + $0x18] sm:$0xff] %vm1567, %v1478
        %1572 = vst.msk [vmem:[#allocation3 + $0x20] sm:$0xff] %vm1567, %v1480
        %1573 = vst.msk [vmem:[#allocation3 + $0x28] sm:$0xff] %vm1567, %v1482
        %1574 = vst.msk [vmem:[#allocation3 + $0x30] sm:$0xff] %vm1567, %v1484
        %1575 = vst.msk [vmem:[#allocation3 + $0x38] sm:$0xff] %vm1567, %v1486
        %1576 = vst.msk [vmem:[#allocation3 + $0x40] sm:$0xff] %vm1567, %v1488
        %1577 = vst.msk [vmem:[#allocation3 + $0x48] sm:$0xff] %vm1567, %v1490
        %1578 = vst.msk [vmem:[#allocation3 + $0x50] sm:$0xff] %vm1567, %v1492
        %1579 = vst.msk [vmem:[#allocation3 + $0x58] sm:$0xff] %vm1567, %v1494
        %1580 = vst.msk [vmem:[#allocation3 + $0x60] sm:$0xff] %vm1567, %v1496
        %1581 = vst.msk [vmem:[#allocation3 + $0x68] sm:$0xff] %vm1567, %v1498
        %1582 = vst.msk [vmem:[#allocation3 + $0x70] sm:$0xff] %vm1567, %v1500
        %1583 = vst.msk [vmem:[#allocation3 + $0x78] sm:$0xff] %vm1567, %v1502
        %1584 = vst.msk [vmem:[#allocation3 + $0x80] sm:$0xff] %vm1567, %v1504
        %1585 = vst.msk [vmem:[#allocation3 + $0x88] sm:$0xff] %vm1567, %v1506
        %1586 = vst.msk [vmem:[#allocation3 + $0x90] sm:$0xff] %vm1567, %v1508
        %1587 = vst.msk [vmem:[#allocation3 + $0x98] sm:$0xff] %vm1567, %v1510
        %1588 = vst.msk [vmem:[#allocation3 + $0xa0] sm:$0xff] %vm1567, %v1512
        %1589 = vst.msk [vmem:[#allocation3 + $0xa8] sm:$0xff] %vm1567, %v1514
        %1590 = vst.msk [vmem:[#allocation3 + $0xb0] sm:$0xff] %vm1567, %v1516
        %1591 = vst.msk [vmem:[#allocation3 + $0xb8] sm:$0xff] %vm1567, %v1518
        %1592 = vst.msk [vmem:[#allocation3 + $0xc0] sm:$0xff] %vm1567, %v1520
        %1593 = vst.msk [vmem:[#allocation3 + $0xc8] sm:$0xff] %vm1567, %v1522
        %1594 = vst.msk [vmem:[#allocation3 + $0xd0] sm:$0xff] %vm1567, %v1524
        %1595 = vst.msk [vmem:[#allocation3 + $0xd8] sm:$0xff] %vm1567, %v1526
        %1596 = vst.msk [vmem:[#allocation3 + $0xe0] sm:$0xff] %vm1567, %v1528
        %1597 = vst.msk [vmem:[#allocation3 + $0xe8] sm:$0xff] %vm1567, %v1530
        %1598 = vst.msk [vmem:[#allocation3 + $0xf0] sm:$0xff] %vm1567, %v1532
        %1599 = vst.msk [vmem:[#allocation3 + $0xf8] sm:$0xff] %vm1567, %v1534
        %v1600 = vld [vmem:[%s1406 + $0x1] sm:$0xff]
        %v1601 = vld [vmem:[%s1406 + $0x9] sm:$0xff]
        %v1602 = vld [vmem:[%s1406 + $0x19] sm:$0xff]
        %v1603 = vld [vmem:[%s1406 + $0x21] sm:$0xff]
        %v1604 = vld [vmem:[%s1406 + $0x31] sm:$0xff]
        %v1605 = vld [vmem:[%s1406 + $0x39] sm:$0xff]
        %v1606 = vld [vmem:[%s1406 + $0x49] sm:$0xff]
        %v1607 = vld [vmem:[%s1406 + $0x51] sm:$0xff]
        %v1608 = vld [vmem:[%s1406 + $0x61] sm:$0xff]
        %v1609 = vld [vmem:[%s1406 + $0x69] sm:$0xff]
        %v1610 = vld [vmem:[%s1406 + $0x79] sm:$0xff]
        %v1611 = vld [vmem:[%s1406 + $0x81] sm:$0xff]
        %v1612 = vld [vmem:[%s1406 + $0x91] sm:$0xff]
        %v1613 = vld [vmem:[%s1406 + $0x99] sm:$0xff]
        %v1614 = vld [vmem:[%s1406 + $0xa9] sm:$0xff]
        %v1615 = vld [vmem:[%s1406 + $0xb1] sm:$0xff]
        %v1616 = vld [vmem:[%s1406 + $0xc1] sm:$0xff]
        %v1617 = vld [vmem:[%s1406 + $0xc9] sm:$0xff]
        %v1618 = vld [vmem:[%s1406 + $0xd9] sm:$0xff]
        %v1619 = vld [vmem:[%s1406 + $0xe1] sm:$0xff]
        %v1620 = vld [vmem:[%s1406 + $0xf1] sm:$0xff]
        %v1621 = vld [vmem:[%s1406 + $0xf9] sm:$0xff]
        %v1622 = vld [vmem:[%s1406 + $0x109] sm:$0xff]
        %v1623 = vld [vmem:[%s1406 + $0x111] sm:$0xff]
        %v1624 = vld [vmem:[%s1406 + $0x121] sm:$0xff]
        %v1625 = vld [vmem:[%s1406 + $0x129] sm:$0xff]
        %v1626 = vld [vmem:[%s1406 + $0x139] sm:$0xff]
        %v1627 = vld [vmem:[%s1406 + $0x141] sm:$0xff]
        %v1628 = vld [vmem:[%s1406 + $0x151] sm:$0xff]
        %v1629 = vld [vmem:[%s1406 + $0x159] sm:$0xff]
        %v1630 = vld [vmem:[%s1406 + $0x169] sm:$0xff]
        %v1631 = vld [vmem:[%s1406 + $0x171] sm:$0xff]
        %1664 = vrot.lane.b32.xlu0 %v1600, 28
        %v1665 = vpop.permute.xlu0 %1664
        %1666 = vrot.lane.b32.xlu0 %v1601, 28
        %v1667 = vpop.permute.xlu0 %1666
        %1668 = vrot.lane.b32.xlu0 %v1602, 28
        %v1669 = vpop.permute.xlu0 %1668
        %1670 = vrot.lane.b32.xlu0 %v1603, 28
        %v1671 = vpop.permute.xlu0 %1670
        %1672 = vrot.lane.b32.xlu0 %v1604, 28
        %v1673 = vpop.permute.xlu0 %1672
        %1674 = vrot.lane.b32.xlu0 %v1605, 28
        %v1675 = vpop.permute.xlu0 %1674
        %1676 = vrot.lane.b32.xlu0 %v1606, 28
        %v1677 = vpop.permute.xlu0 %1676
        %1678 = vrot.lane.b32.xlu0 %v1607, 28
        %v1679 = vpop.permute.xlu0 %1678
        %1680 = vrot.lane.b32.xlu0 %v1608, 28
        %v1681 = vpop.permute.xlu0 %1680
        %1682 = vrot.lane.b32.xlu0 %v1609, 28
        %v1683 = vpop.permute.xlu0 %1682
        %1684 = vrot.lane.b32.xlu0 %v1610, 28
        %v1685 = vpop.permute.xlu0 %1684
        %1686 = vrot.lane.b32.xlu0 %v1611, 28
        %v1687 = vpop.permute.xlu0 %1686
        %1688 = vrot.lane.b32.xlu0 %v1612, 28
        %v1689 = vpop.permute.xlu0 %1688
        %1690 = vrot.lane.b32.xlu0 %v1613, 28
        %v1691 = vpop.permute.xlu0 %1690
        %1692 = vrot.lane.b32.xlu0 %v1614, 28
        %v1693 = vpop.permute.xlu0 %1692
        %1694 = vrot.lane.b32.xlu0 %v1615, 28
        %v1695 = vpop.permute.xlu0 %1694
        %1696 = vrot.lane.b32.xlu0 %v1616, 28
        %v1697 = vpop.permute.xlu0 %1696
        %1698 = vrot.lane.b32.xlu0 %v1617, 28
        %v1699 = vpop.permute.xlu0 %1698
        %1700 = vrot.lane.b32.xlu0 %v1618, 28
        %v1701 = vpop.permute.xlu0 %1700
        %1702 = vrot.lane.b32.xlu0 %v1619, 28
        %v1703 = vpop.permute.xlu0 %1702
        %1704 = vrot.lane.b32.xlu0 %v1620, 28
        %v1705 = vpop.permute.xlu0 %1704
        %1706 = vrot.lane.b32.xlu0 %v1621, 28
        %v1707 = vpop.permute.xlu0 %1706
        %1708 = vrot.lane.b32.xlu0 %v1622, 28
        %v1709 = vpop.permute.xlu0 %1708
        %1710 = vrot.lane.b32.xlu0 %v1623, 28
        %v1711 = vpop.permute.xlu0 %1710
        %1712 = vrot.lane.b32.xlu0 %v1624, 28
        %v1713 = vpop.permute.xlu0 %1712
        %1714 = vrot.lane.b32.xlu0 %v1625, 28
        %v1715 = vpop.permute.xlu0 %1714
        %1716 = vrot.lane.b32.xlu0 %v1626, 28
        %v1717 = vpop.permute.xlu0 %1716
        %1718 = vrot.lane.b32.xlu0 %v1627, 28
        %v1719 = vpop.permute.xlu0 %1718
        %1720 = vrot.lane.b32.xlu0 %v1628, 28
        %v1721 = vpop.permute.xlu0 %1720
        %1722 = vrot.lane.b32.xlu0 %v1629, 28
        %v1723 = vpop.permute.xlu0 %1722
        %1724 = vrot.lane.b32.xlu0 %v1630, 28
        %v1725 = vpop.permute.xlu0 %1724
        %1726 = vrot.lane.b32.xlu0 %v1631, 28
        %v1727 = vpop.permute.xlu0 %1726
        %vm1760 = vcmask 261344
        %1761 = vst.msk [vmem:[#allocation3] sm:$0xff] %vm1760, %v1665
        %1762 = vst.msk [vmem:[#allocation3 + $0x8] sm:$0xff] %vm1760, %v1667
        %1763 = vst.msk [vmem:[#allocation3 + $0x10] sm:$0xff] %vm1760, %v1669
        %1764 = vst.msk [vmem:[#allocation3 + $0x18] sm:$0xff] %vm1760, %v1671
        %1765 = vst.msk [vmem:[#allocation3 + $0x20] sm:$0xff] %vm1760, %v1673
        %1766 = vst.msk [vmem:[#allocation3 + $0x28] sm:$0xff] %vm1760, %v1675
        %1767 = vst.msk [vmem:[#allocation3 + $0x30] sm:$0xff] %vm1760, %v1677
        %1768 = vst.msk [vmem:[#allocation3 + $0x38] sm:$0xff] %vm1760, %v1679
        %1769 = vst.msk [vmem:[#allocation3 + $0x40] sm:$0xff] %vm1760, %v1681
        %1770 = vst.msk [vmem:[#allocation3 + $0x48] sm:$0xff] %vm1760, %v1683
        %1771 = vst.msk [vmem:[#allocation3 + $0x50] sm:$0xff] %vm1760, %v1685
        %1772 = vst.msk [vmem:[#allocation3 + $0x58] sm:$0xff] %vm1760, %v1687
        %1773 = vst.msk [vmem:[#allocation3 + $0x60] sm:$0xff] %vm1760, %v1689
        %1774 = vst.msk [vmem:[#allocation3 + $0x68] sm:$0xff] %vm1760, %v1691
        %1775 = vst.msk [vmem:[#allocation3 + $0x70] sm:$0xff] %vm1760, %v1693
        %1776 = vst.msk [vmem:[#allocation3 + $0x78] sm:$0xff] %vm1760, %v1695
        %1777 = vst.msk [vmem:[#allocation3 + $0x80] sm:$0xff] %vm1760, %v1697
        %1778 = vst.msk [vmem:[#allocation3 + $0x88] sm:$0xff] %vm1760, %v1699
        %1779 = vst.msk [vmem:[#allocation3 + $0x90] sm:$0xff] %vm1760, %v1701
        %1780 = vst.msk [vmem:[#allocation3 + $0x98] sm:$0xff] %vm1760, %v1703
        %1781 = vst.msk [vmem:[#allocation3 + $0xa0] sm:$0xff] %vm1760, %v1705
        %1782 = vst.msk [vmem:[#allocation3 + $0xa8] sm:$0xff] %vm1760, %v1707
        %1783 = vst.msk [vmem:[#allocation3 + $0xb0] sm:$0xff] %vm1760, %v1709
        %1784 = vst.msk [vmem:[#allocation3 + $0xb8] sm:$0xff] %vm1760, %v1711
        %1785 = vst.msk [vmem:[#allocation3 + $0xc0] sm:$0xff] %vm1760, %v1713
        %1786 = vst.msk [vmem:[#allocation3 + $0xc8] sm:$0xff] %vm1760, %v1715
        %1787 = vst.msk [vmem:[#allocation3 + $0xd0] sm:$0xff] %vm1760, %v1717
        %1788 = vst.msk [vmem:[#allocation3 + $0xd8] sm:$0xff] %vm1760, %v1719
        %1789 = vst.msk [vmem:[#allocation3 + $0xe0] sm:$0xff] %vm1760, %v1721
        %1790 = vst.msk [vmem:[#allocation3 + $0xe8] sm:$0xff] %vm1760, %v1723
        %1791 = vst.msk [vmem:[#allocation3 + $0xf0] sm:$0xff] %vm1760, %v1725
        %1792 = vst.msk [vmem:[#allocation3 + $0xf8] sm:$0xff] %vm1760, %v1727
        %v1793 = vld [vmem:[%s1406 + $0x2] sm:$0xff]
        %v1794 = vld [vmem:[%s1406 + $0xa] sm:$0xff]
        %v1795 = vld [vmem:[%s1406 + $0x1a] sm:$0xff]
        %v1796 = vld [vmem:[%s1406 + $0x22] sm:$0xff]
        %v1797 = vld [vmem:[%s1406 + $0x32] sm:$0xff]
        %v1798 = vld [vmem:[%s1406 + $0x3a] sm:$0xff]
        %v1799 = vld [vmem:[%s1406 + $0x4a] sm:$0xff]
        %v1800 = vld [vmem:[%s1406 + $0x52] sm:$0xff]
        %v1801 = vld [vmem:[%s1406 + $0x62] sm:$0xff]
        %v1802 = vld [vmem:[%s1406 + $0x6a] sm:$0xff]
        %v1803 = vld [vmem:[%s1406 + $0x7a] sm:$0xff]
        %v1804 = vld [vmem:[%s1406 + $0x82] sm:$0xff]
        %v1805 = vld [vmem:[%s1406 + $0x92] sm:$0xff]
        %v1806 = vld [vmem:[%s1406 + $0x9a] sm:$0xff]
        %v1807 = vld [vmem:[%s1406 + $0xaa] sm:$0xff]
        %v1808 = vld [vmem:[%s1406 + $0xb2] sm:$0xff]
        %v1809 = vld [vmem:[%s1406 + $0xc2] sm:$0xff]
        %v1810 = vld [vmem:[%s1406 + $0xca] sm:$0xff]
        %v1811 = vld [vmem:[%s1406 + $0xda] sm:$0xff]
        %v1812 = vld [vmem:[%s1406 + $0xe2] sm:$0xff]
        %v1813 = vld [vmem:[%s1406 + $0xf2] sm:$0xff]
        %v1814 = vld [vmem:[%s1406 + $0xfa] sm:$0xff]
        %v1815 = vld [vmem:[%s1406 + $0x10a] sm:$0xff]
        %v1816 = vld [vmem:[%s1406 + $0x112] sm:$0xff]
        %v1817 = vld [vmem:[%s1406 + $0x122] sm:$0xff]
        %v1818 = vld [vmem:[%s1406 + $0x12a] sm:$0xff]
        %v1819 = vld [vmem:[%s1406 + $0x13a] sm:$0xff]
        %v1820 = vld [vmem:[%s1406 + $0x142] sm:$0xff]
        %v1821 = vld [vmem:[%s1406 + $0x152] sm:$0xff]
        %v1822 = vld [vmem:[%s1406 + $0x15a] sm:$0xff]
        %v1823 = vld [vmem:[%s1406 + $0x16a] sm:$0xff]
        %v1824 = vld [vmem:[%s1406 + $0x172] sm:$0xff]
        %1857 = vrot.lane.b32.xlu0 %v1793, 32
        %v1858 = vpop.permute.xlu0 %1857
        %1859 = vrot.lane.b32.xlu0 %v1794, 32
        %v1860 = vpop.permute.xlu0 %1859
        %1861 = vrot.lane.b32.xlu0 %v1795, 32
        %v1862 = vpop.permute.xlu0 %1861
        %1863 = vrot.lane.b32.xlu0 %v1796, 32
        %v1864 = vpop.permute.xlu0 %1863
        %1865 = vrot.lane.b32.xlu0 %v1797, 32
        %v1866 = vpop.permute.xlu0 %1865
        %1867 = vrot.lane.b32.xlu0 %v1798, 32
        %v1868 = vpop.permute.xlu0 %1867
        %1869 = vrot.lane.b32.xlu0 %v1799, 32
        %v1870 = vpop.permute.xlu0 %1869
        %1871 = vrot.lane.b32.xlu0 %v1800, 32
        %v1872 = vpop.permute.xlu0 %1871
        %1873 = vrot.lane.b32.xlu0 %v1801, 32
        %v1874 = vpop.permute.xlu0 %1873
        %1875 = vrot.lane.b32.xlu0 %v1802, 32
        %v1876 = vpop.permute.xlu0 %1875
        %1877 = vrot.lane.b32.xlu0 %v1803, 32
        %v1878 = vpop.permute.xlu0 %1877
        %1879 = vrot.lane.b32.xlu0 %v1804, 32
        %v1880 = vpop.permute.xlu0 %1879
        %1881 = vrot.lane.b32.xlu0 %v1805, 32
        %v1882 = vpop.permute.xlu0 %1881
        %1883 = vrot.lane.b32.xlu0 %v1806, 32
        %v1884 = vpop.permute.xlu0 %1883
        %1885 = vrot.lane.b32.xlu0 %v1807, 32
        %v1886 = vpop.permute.xlu0 %1885
        %1887 = vrot.lane.b32.xlu0 %v1808, 32
        %v1888 = vpop.permute.xlu0 %1887
        %1889 = vrot.lane.b32.xlu0 %v1809, 32
        %v1890 = vpop.permute.xlu0 %1889
        %1891 = vrot.lane.b32.xlu0 %v1810, 32
        %v1892 = vpop.permute.xlu0 %1891
        %1893 = vrot.lane.b32.xlu0 %v1811, 32
        %v1894 = vpop.permute.xlu0 %1893
        %1895 = vrot.lane.b32.xlu0 %v1812, 32
        %v1896 = vpop.permute.xlu0 %1895
        %1897 = vrot.lane.b32.xlu0 %v1813, 32
        %v1898 = vpop.permute.xlu0 %1897
        %1899 = vrot.lane.b32.xlu0 %v1814, 32
        %v1900 = vpop.permute.xlu0 %1899
        %1901 = vrot.lane.b32.xlu0 %v1815, 32
        %v1902 = vpop.permute.xlu0 %1901
        %1903 = vrot.lane.b32.xlu0 %v1816, 32
        %v1904 = vpop.permute.xlu0 %1903
        %1905 = vrot.lane.b32.xlu0 %v1817, 32
        %v1906 = vpop.permute.xlu0 %1905
        %1907 = vrot.lane.b32.xlu0 %v1818, 32
        %v1908 = vpop.permute.xlu0 %1907
        %1909 = vrot.lane.b32.xlu0 %v1819, 32
        %v1910 = vpop.permute.xlu0 %1909
        %1911 = vrot.lane.b32.xlu0 %v1820, 32
        %v1912 = vpop.permute.xlu0 %1911
        %1913 = vrot.lane.b32.xlu0 %v1821, 32
        %v1914 = vpop.permute.xlu0 %1913
        %1915 = vrot.lane.b32.xlu0 %v1822, 32
        %v1916 = vpop.permute.xlu0 %1915
        %1917 = vrot.lane.b32.xlu0 %v1823, 32
        %v1918 = vpop.permute.xlu0 %1917
        %1919 = vrot.lane.b32.xlu0 %v1824, 32
        %v1920 = vpop.permute.xlu0 %1919
        %vm1953 = vcmask 294144
        %1954 = vst.msk [vmem:[#allocation3] sm:$0xff] %vm1953, %v1858
        %1955 = vst.msk [vmem:[#allocation3 + $0x8] sm:$0xff] %vm1953, %v1860
        %1956 = vst.msk [vmem:[#allocation3 + $0x10] sm:$0xff] %vm1953, %v1862
        %1957 = vst.msk [vmem:[#allocation3 + $0x18] sm:$0xff] %vm1953, %v1864
        %1958 = vst.msk [vmem:[#allocation3 + $0x20] sm:$0xff] %vm1953, %v1866
        %1959 = vst.msk [vmem:[#allocation3 + $0x28] sm:$0xff] %vm1953, %v1868
        %1960 = vst.msk [vmem:[#allocation3 + $0x30] sm:$0xff] %vm1953, %v1870
        %1961 = vst.msk [vmem:[#allocation3 + $0x38] sm:$0xff] %vm1953, %v1872
        %1962 = vst.msk [vmem:[#allocation3 + $0x40] sm:$0xff] %vm1953, %v1874
        %1963 = vst.msk [vmem:[#allocation3 + $0x48] sm:$0xff] %vm1953, %v1876
        %1964 = vst.msk [vmem:[#allocation3 + $0x50] sm:$0xff] %vm1953, %v1878
        %1965 = vst.msk [vmem:[#allocation3 + $0x58] sm:$0xff] %vm1953, %v1880
        %1966 = vst.msk [vmem:[#allocation3 + $0x60] sm:$0xff] %vm1953, %v1882
        %1967 = vst.msk [vmem:[#allocation3 + $0x68] sm:$0xff] %vm1953, %v1884
        %1968 = vst.msk [vmem:[#allocation3 + $0x70] sm:$0xff] %vm1953, %v1886
        %1969 = vst.msk [vmem:[#allocation3 + $0x78] sm:$0xff] %vm1953, %v1888
        %1970 = vst.msk [vmem:[#allocation3 + $0x80] sm:$0xff] %vm1953, %v1890
        %1971 = vst.msk [vmem:[#allocation3 + $0x88] sm:$0xff] %vm1953, %v1892
        %1972 = vst.msk [vmem:[#allocation3 + $0x90] sm:$0xff] %vm1953, %v1894
        %1973 = vst.msk [vmem:[#allocation3 + $0x98] sm:$0xff] %vm1953, %v1896
        %1974 = vst.msk [vmem:[#allocation3 + $0xa0] sm:$0xff] %vm1953, %v1898
        %1975 = vst.msk [vmem:[#allocation3 + $0xa8] sm:$0xff] %vm1953, %v1900
        %1976 = vst.msk [vmem:[#allocation3 + $0xb0] sm:$0xff] %vm1953, %v1902
        %1977 = vst.msk [vmem:[#allocation3 + $0xb8] sm:$0xff] %vm1953, %v1904
        %1978 = vst.msk [vmem:[#allocation3 + $0xc0] sm:$0xff] %vm1953, %v1906
        %1979 = vst.msk [vmem:[#allocation3 + $0xc8] sm:$0xff] %vm1953, %v1908
        %1980 = vst.msk [vmem:[#allocation3 + $0xd0] sm:$0xff] %vm1953, %v1910
        %1981 = vst.msk [vmem:[#allocation3 + $0xd8] sm:$0xff] %vm1953, %v1912
        %1982 = vst.msk [vmem:[#allocation3 + $0xe0] sm:$0xff] %vm1953, %v1914
        %1983 = vst.msk [vmem:[#allocation3 + $0xe8] sm:$0xff] %vm1953, %v1916
        %1984 = vst.msk [vmem:[#allocation3 + $0xf0] sm:$0xff] %vm1953, %v1918
        %1985 = vst.msk [vmem:[#allocation3 + $0xf8] sm:$0xff] %vm1953, %v1920
        %v1986 = vld [vmem:[#allocation3] sm:$0xff]
        %v1987 = vld [vmem:[#allocation3 + $0x8] sm:$0xff]
        %v1988 = vld [vmem:[#allocation3 + $0x10] sm:$0xff]
        %v1989 = vld [vmem:[#allocation3 + $0x18] sm:$0xff]
        %v1990 = vld [vmem:[#allocation3 + $0x20] sm:$0xff]
        %v1991 = vld [vmem:[#allocation3 + $0x28] sm:$0xff]
        %v1992 = vld [vmem:[#allocation3 + $0x30] sm:$0xff]
        %v1993 = vld [vmem:[#allocation3 + $0x38] sm:$0xff]
        %v1994 = vld [vmem:[#allocation3 + $0x40] sm:$0xff]
        %v1995 = vld [vmem:[#allocation3 + $0x48] sm:$0xff]
        %v1996 = vld [vmem:[#allocation3 + $0x50] sm:$0xff]
        %v1997 = vld [vmem:[#allocation3 + $0x58] sm:$0xff]
        %v1998 = vld [vmem:[#allocation3 + $0x60] sm:$0xff]
        %v1999 = vld [vmem:[#allocation3 + $0x68] sm:$0xff]
        %v2000 = vld [vmem:[#allocation3 + $0x70] sm:$0xff]
        %v2001 = vld [vmem:[#allocation3 + $0x78] sm:$0xff]
        %v2002 = vld [vmem:[#allocation3 + $0x80] sm:$0xff]
        %v2003 = vld [vmem:[#allocation3 + $0x88] sm:$0xff]
        %v2004 = vld [vmem:[#allocation3 + $0x90] sm:$0xff]
        %v2005 = vld [vmem:[#allocation3 + $0x98] sm:$0xff]
        %v2006 = vld [vmem:[#allocation3 + $0xa0] sm:$0xff]
        %v2007 = vld [vmem:[#allocation3 + $0xa8] sm:$0xff]
        %v2008 = vld [vmem:[#allocation3 + $0xb0] sm:$0xff]
        %v2009 = vld [vmem:[#allocation3 + $0xb8] sm:$0xff]
        %v2010 = vld [vmem:[#allocation3 + $0xc0] sm:$0xff]
        %v2011 = vld [vmem:[#allocation3 + $0xc8] sm:$0xff]
        %v2012 = vld [vmem:[#allocation3 + $0xd0] sm:$0xff]
        %v2013 = vld [vmem:[#allocation3 + $0xd8] sm:$0xff]
        %v2014 = vld [vmem:[#allocation3 + $0xe0] sm:$0xff]
        %v2015 = vld [vmem:[#allocation3 + $0xe8] sm:$0xff]
        %v2016 = vld [vmem:[#allocation3 + $0xf0] sm:$0xff]
        %v2017 = vld [vmem:[#allocation3 + $0xf8] sm:$0xff]
        %v2018 = vpack.c.bf16 %v1987, %v1986
        %v2019 = vpack.c.bf16 %v1989, %v1988
        %v2020 = vpack.c.bf16 %v1991, %v1990
        %v2021 = vpack.c.bf16 %v1993, %v1992
        %v2022 = vpack.c.bf16 %v1995, %v1994
        %v2023 = vpack.c.bf16 %v1997, %v1996
        %v2024 = vpack.c.bf16 %v1999, %v1998
        %v2025 = vpack.c.bf16 %v2001, %v2000
        %v2026 = vpack.c.bf16 %v2003, %v2002
        %v2027 = vpack.c.bf16 %v2005, %v2004
        %v2028 = vpack.c.bf16 %v2007, %v2006
        %v2029 = vpack.c.bf16 %v2009, %v2008
        %v2030 = vpack.c.bf16 %v2011, %v2010
        %v2031 = vpack.c.bf16 %v2013, %v2012
        %v2032 = vpack.c.bf16 %v2015, %v2014
        %v2033 = vpack.c.bf16 %v2017, %v2016
        %v2034 = vld [vmem:[%s1] sm:$0xf]
        %v2035 = vld [vmem:[%s2] sm:$0xff]
        %2037 = vset.pattern.permute.xlu0 0
        %2038 = vperm.xlu0 %2037, %v2035
        %v2039 = vpop.permute.xlu0 %2038
        %vm2041 = vcmask 293888
        %v2043 = vsel %vm2041, %v2034, 0
        %v2046 = vsel %vm2041, %v2018, 0
        %v2049 = vsel %vm2041, %v2019, 0
        %v2052 = vsel %vm2041, %v2020, 0
        %v2055 = vsel %vm2041, %v2021, 0
        %v2058 = vsel %vm2041, %v2022, 0
        %v2061 = vsel %vm2041, %v2023, 0
        %v2064 = vsel %vm2041, %v2024, 0
        %v2067 = vsel %vm2041, %v2025, 0
        %v2070 = vsel %vm2041, %v2026, 0
        %v2073 = vsel %vm2041, %v2027, 0
        %v2076 = vsel %vm2041, %v2028, 0
        %v2079 = vsel %vm2041, %v2029, 0
        %v2082 = vsel %vm2041, %v2030, 0
        %v2085 = vsel %vm2041, %v2031, 0
        %v2088 = vsel %vm2041, %v2032, 0
        %v2091 = vsel %vm2041, %v2033, 0
        %2093 = vmatprep.subr.bf16.mxu0 0
        %2094 = vmatpush1.bf16.xpose.msra.mxu0 %v2046
        %2095 = vmatprep.subr.bf16.mxu0 0
        %2096 = vmatpush1.bf16.xpose.msra.mxu0 %v2049
        %2097 = vmatprep.subr.bf16.mxu0 0
        %2098 = vmatpush1.bf16.xpose.msra.mxu0 %v2052
        %2099 = vmatprep.subr.bf16.mxu0 0
        %2100 = vmatpush1.bf16.xpose.msra.mxu0 %v2055
        %2101 = vmatprep.subr.bf16.mxu0 0
        %2102 = vmatpush1.bf16.xpose.msra.mxu0 %v2058
        %2103 = vmatprep.subr.bf16.mxu0 0
        %2104 = vmatpush1.bf16.xpose.msra.mxu0 %v2061
        %2105 = vmatprep.subr.bf16.mxu0 0
        %2106 = vmatpush1.bf16.xpose.msra.mxu0 %v2064
        %2107 = vmatprep.subr.bf16.mxu0 0
        %2108 = vmatpush1.bf16.xpose.msra.mxu0 %v2067
        %2109 = vmatprep.subr.bf16.mxu0 0
        %2110 = vmatpush1.bf16.xpose.msra.mxu0 %v2070
        %2111 = vmatprep.subr.bf16.mxu0 0
        %2112 = vmatpush1.bf16.xpose.msra.mxu0 %v2073
        %2113 = vmatprep.subr.bf16.mxu0 0
        %2114 = vmatpush1.bf16.xpose.msra.mxu0 %v2076
        %2115 = vmatprep.subr.bf16.mxu0 0
        %2116 = vmatpush1.bf16.xpose.msra.mxu0 %v2079
        %2117 = vmatprep.subr.bf16.mxu0 0
        %2118 = vmatpush1.bf16.xpose.msra.mxu0 %v2082
        %2119 = vmatprep.subr.bf16.mxu0 0
        %2120 = vmatpush1.bf16.xpose.msra.mxu0 %v2085
        %2121 = vmatprep.subr.bf16.mxu0 0
        %2122 = vmatpush1.bf16.xpose.msra.mxu0 %v2088
        %2123 = vmatprep.subr.bf16.mxu0 0
        %2124 = vmatpush1.bf16.xpose.msra.mxu0 %v2091
        %2125 = vmatprep.mubr.bf16.mxu0 0
        %2126 = vmatmul.mubr.bf16.gmra.mrb[0].mxu0 %v2043
        %v2127 = vpop.f32.mrb[0].mxu0
        %v2128 = vadd.f32 %v2039, %v2127
        %v2129 = vpop.f32.mrb[0].mxu0
        %v2130 = vadd.f32 %v2039, %v2129
        %v2131 = vpop.f32.mrb[0].mxu0
        %v2132 = vpop.f32.mrb[0].mxu0
        %2133 = vdwg.mxu0
        %v2134 = vadd.f32 %v2128, %v2130
        %2135 = vadd.xlane.f32.xlu0 %v2134
        %v2136 = vpop.xlane.xlu0 %2135
        %v2137 = vrot.slane %v2136, 4
        %v2138 = vadd.f32 %v2136, %v2137
        %v2139 = vrot.slane %v2138, 2
        %v2140 = vadd.f32 %v2138, %v2139
        %v2141 = vrot.slane %v2140, 1
        %v2142 = vadd.f32 %v2140, %v2141
        %s2143 = vtos %v2142
        %v2144 = vmul.f32 %v2128, %v2128
        %v2145 = vmul.f32 %v2130, %v2130
        %v2146 = vadd.f32 %v2144, %v2145
        %2147 = vadd.xlane.f32.xlu0 %v2146
        %v2148 = vpop.xlane.xlu0 %2147
        %v2149 = vrot.slane %v2148, 4
        %v2150 = vadd.f32 %v2148, %v2149
        %v2151 = vrot.slane %v2150, 2
        %v2152 = vadd.f32 %v2150, %v2151
        %v2153 = vrot.slane %v2152, 1
        %v2154 = vadd.f32 %v2152, %v2153
        %s2155 = vtos %v2154
        %v2156 = vrcp.pop 2048.0
        %s2157 = vtos %v2156
        %s2158 = smul.f32 %s2143, %s2157
        %v2159 = vrcp.pop 2048.0
        %s2160 = vtos %v2159
        %s2161 = smul.f32 %s2155, %s2160
        %s2162 = smul.f32 %s2158, %s2158
        %s2163 = ssub.f32 %s2161, %s2162
        %s2164 = sadd.f32 %s2163, 1e-05
        %v2165 = vstv %s2164
        %v2166 = vrsqrt.pop %v2165
        %s2167 = vtos %v2166
        %v2168 = vld [vmem:[%s3] sm:$0xff]
        %v2169 = vstv %s2167
        %v2170 = vmul.f32 %v2168, %v2169
        %v2171 = vld [vmem:[%s4] sm:$0xff]
        %v2172 = vstv %s2158
        %v2173 = vmul.f32 %v2172, %v2170
        %v2174 = vsub.f32 %v2171, %v2173
        %2176 = vset.pattern.permute.xlu0 0
        %2177 = vperm.xlu0 %2176, %v2170
        %v2178 = vpop.permute.xlu0 %2177
        %v2180 = vmul.f32 %v2128, %v2178
        %v2181 = vmul.f32 %v2130, %v2178
        %2183 = vset.pattern.permute.xlu0 0
        %2184 = vperm.xlu0 %2183, %v2174
        %v2185 = vpop.permute.xlu0 %2184
        %v2187 = vadd.f32 %v2180, %v2185
        %v2188 = vadd.f32 %v2181, %v2185
        %v2189 = vmax.f32 %v2187, 0.0
        %v2190 = vmax.f32 %v2188, 0.0
        %2191 = vst [vmem:[%s217] sm:$0xff] %v2189
        %2192 = vst [vmem:[%s217 + $0x8] sm:$0xff] %v2190
        %s2193 = sand.u32 %s137, 1
        %s2194 = scalar_lea.sflag [#allocation5], %s2193
        %s2195 = sand.u32 %s137, 1
        %s2196 = smul.addr %s2195, 16
        %s2197 = scalar_lea.vmem [#allocation4], %s2196
        // Predicated region
        $region41: #{tpu_custom_call.1} parent=39 // pred_check
          %p2198 = pneg %p147
        $region42: #{tpu_custom_call.1} parent=39 // pred_check_branch
          %2200 = sbr.rel (%p2198) target = $region44
        $region43: #{tpu_custom_call.1} parent=39 // pred_region
          %s2202 = ssub.s32 256, 256
          %2203 = vsyncadd %s2194, %s2202
          %s2204 = smul.addr %s19, 2
          %s2205 = smul.addr %s2204, 128
          %s2206 = scalar_lea.hbm %s5, %s2205
          %s2208 = sshll.u32 %s2197, 4
          %s2209 = int_to_ptr.vmem [resolvable:$true] %s2208
          %2211 = dma.vmem_to_hbm [thread:$0]  %s2209, 256, %s2206, %s2194
        $region44: #{tpu_custom_call.1} parent=39 // pred_fallthru
          _
      $region40: #{tpu_custom_call.1} parent=5 // pred_fallthru
        _
      %p2212 = scmp.le.s32.totalorder 2, %s14
      // Predicated region
      $region45: #{tpu_custom_call.1} parent=5 // pred_check
        %p2213 = pneg %p2212
      $region46: #{tpu_custom_call.1} parent=5 // pred_check_branch
        %2215 = sbr.rel (%p2213) target = $region48
      $region47: #{tpu_custom_call.1} parent=5 // pred_region
        %s2216 = ssub.s32 %s14, 2
        // Predicated region
        $region49: #{tpu_custom_call.1} parent=47 // pred_check
          %p2217 = pneg %p153
        $region50: #{tpu_custom_call.1} parent=47 // pred_check_branch
          %2219 = sbr.rel (%p2217) target = $region52
        $region51: #{tpu_custom_call.1} parent=47 // pred_region
          %s2220 = sand.u32 %s138, 1
          %s2221 = scalar_lea.sflag [#allocation5], %s2220
          %s2222 = sand.u32 %s138, 1
          %s2223 = smul.addr %s2222, 16
          %s2224 = scalar_lea.vmem [#allocation4], %s2223
          %2225 = dma.done %s2221, 256
        $region52: #{tpu_custom_call.1} parent=47 // pred_fallthru
          _
      $region48: #{tpu_custom_call.1} parent=5 // pred_fallthru
        _
    $region6: #{tpu_custom_call.1} parent=1 // loop_footer
      %s18 = sadd.s32 1, %s14
    $region7: #{tpu_custom_call.1} parent=1 // loop_footer_branch
      %13 = sbr.rel target = $region3
    $region8: #{tpu_custom_call.1} parent=1 // loop_exit
      _
    %2226 = vsyncpa [#allocation5], 1
    %s2227 = scalar_lea.sflag [#allocation5], 1
    %2228 = vsyncpa %s2227, 1

</llo_original>
